<compile_context>
chip_gen: v5e
topology: v5e:2x2
jax: 0.10.0
libtpu: 0.0.40
codegen_flags: <defaults>
</compile_context>

<pallas_src>
import functools

import jax
import jax.numpy as jnp
from jax import lax
from jax.experimental import pallas as pl
from jax.experimental.pallas import tpu as pltpu


def _round_up(x, m):
    return (x + m - 1) // m * m


def _largest_divisor_at_most(n, cap):
    c = max(1, min(n, cap))
    while n % c:
        c -= 1
    return c


def _vmem_limit_bytes():
    """Generation-aware scoped-VMEM limit: ~85% of physical per-TensorCore VMEM."""
    cap = 64 * 1024 * 1024
    try:
        info = pltpu.get_tpu_info()
        cap = int(getattr(info, "vmem_capacity_bytes", cap))
    except Exception:
        pass
    return int(cap * 0.85)   # ≈54 MiB on v7x, ≈109 MiB on v5e/v6e


# ----------------------------------------------------------------------------
# Kernel 1: sequential LSTM recurrence with an in-kernel time loop.
# ----------------------------------------------------------------------------
def _lstm_recurrence_kernel(x_ref, wih_ref, whh_ref, b_ref,
                            hist_ref, hn_ref, cn_ref,
                            h_scr, c_scr, xg_scr,
                            *, t_chunk, h_pad, seq_len, mm_dtype):
    """Runs `t_chunk` LSTM steps over a resident (t_chunk, B_pad, E_pad) slab.

    The input projection (x @ W_ih^T + bias) is hoisted out of the serial loop into one
    full-M MXU matmul per chunk; each step only does the (B_pad, H_pad)@(H_pad, 4H_pad)
    recurrent matmul plus gate elementwise math (VPU/EUP).
    """
    chunk = pl.program_id(0)

    @pl.when(chunk == 0)
    def _():
        # hidden=None in the PyTorch forward -> zero-initialized (h0, c0)
        h_scr[...] = jnp.zeros_like(h_scr)
        c_scr[...] = jnp.zeros_like(c_scr)

    b_pad = h_scr.shape[0]
    e_pad = x_ref.shape[-1]

    # --- hoisted input projection for the whole chunk (M = t_chunk * B_pad rows) -------
    # B_pad is a sublane-tile multiple, so collapsing (t_chunk, B_pad) is a free reshape.
    x2d = x_ref[...].reshape(t_chunk * b_pad, e_pad)
    xg = jnp.dot(x2d, wih_ref[...], preferred_element_type=jnp.float32) + b_ref[...]
    xg_scr[...] = xg.reshape(t_chunk, b_pad, 4 * h_pad)

    t0 = chunk * t_chunk

    def step(t, carry):
        del carry
        h_prev = h_scr[...]                # (B_pad, H_pad) f32 carry
        c_prev = c_scr[...]

        # gates = (x @ W_ih^T + b)  +  h_prev @ W_hh^T   -> (B_pad, 4*H_pad) f32
        gates = xg_scr[t] + jnp.dot(h_prev.astype(mm_dtype), whh_ref[...],
                                    preferred_element_type=jnp.float32)

        # Each gate block is H_pad wide (multiple of 128) -> 128-lane-aligned slices.
        i_g = jax.nn.sigmoid(gates[:, 0 * h_pad:1 * h_pad])
        f_g = jax.nn.sigmoid(gates[:, 1 * h_pad:2 * h_pad])
        g_g = jnp.tanh(gates[:, 2 * h_pad:3 * h_pad])
        o_g = jax.nn.sigmoid(gates[:, 3 * h_pad:4 * h_pad])

        c_new = f_g * c_prev + i_g * g_g
        h_new = o_g * jnp.tanh(c_new)

        hist_ref[t] = h_new.astype(hist_ref.dtype)     # h history for deferred projection

        # Guard the carries so zero-padded tail steps (t0 + t >= seq_len) do not advance
        # the hidden state returned to the caller.
        @pl.when(t0 + t < seq_len)
        def _():
            h_scr[...] = h_new
            c_scr[...] = c_new

        return 0

    lax.fori_loop(0, t_chunk, step, 0)

    # Resident outputs (constant out index_map): the last grid step's value lands in HBM.
    hn_ref[...] = h_scr[...]
    cn_ref[...] = c_scr[...]


# ----------------------------------------------------------------------------
# Kernel 2: deferred, fully parallel vocab projection  logits = h @ W_out^T + b_out.
# ----------------------------------------------------------------------------
def _vocab_projection_kernel(h_ref, w_ref, b_ref, out_ref):
    # h_ref: (1, T_tile, H_pad)   w_ref: (H_pad, V_tile)   b_ref: (1, V_tile)
    out_ref[0] = (jnp.dot(h_ref[0], w_ref[...], preferred_element_type=jnp.float32)
                  + b_ref[...]).astype(out_ref.dtype)


# ----------------------------------------------------------------------------
# Forward pass (inference, hidden=None).
# ----------------------------------------------------------------------------
def char_rnn_forward(input_ids, params, *, matmul_dtype=jnp.bfloat16,
                     t_tile_cap=256, v_tile_cap=1024):
    """Pallas implementation of CharRNN.forward.

    matmul_dtype=bfloat16 (default) uses the MXU-native path with f32 accumulation;
    pass jnp.float32 for bit-tighter numerics at ~3x matmul cost.
    """
    B, T = input_ids.shape
    emb = params["embedding"]      # (V, E)
    w_ih = params["w_ih"]          # (4H, E)  PyTorch layout, gate order [i, f, g, o]
    w_hh = params["w_hh"]          # (4H, H)
    b_ih = params["b_ih"]          # (4H,)
    b_hh = params["b_hh"]          # (4H,)
    w_out = params["w_out"]        # (V, H)
    b_out = params["b_out"]        # (V,)

    V, E = emb.shape
    H = w_hh.shape[1]
    f32 = jnp.float32
    mm_bytes = jnp.dtype(matmul_dtype).itemsize
    is_packed = mm_bytes < 4
    row_mult = 16 if is_packed else 8            # bf16 packs 2 rows / sublane

    B_pad = _round_up(B, row_mult)
    E_pad = _round_up(E, 128)      # lane-dense contraction dims
    H_pad = _round_up(H, 128)
    V_pad = _round_up(V, 128)      # lane-dense logits

    vmem_limit = _vmem_limit_bytes()

    # ---- time tiling --------------------------------------------------------------
    # t_tile: projection M-tile. 256 fills the 256-row MXU on v6e/v7x; on v5e (128x128
    # MXU) it just runs as two row passes, so a single value is fine.
    t_tile = min(_round_up(T, row_mult), _round_up(t_tile_cap, row_mult))

    # t_chunk from an explicit VMEM formula (double-buffered x in / hist out blocks,
    # double-buffered weights since constant blocks are still pipelined, plus the
    # hoisted-gate f32 scratch and its matmul temporary).
    fixed_bytes = (2 * (E_pad + H_pad) * 4 * H_pad * mm_bytes    # W_ih^T + W_hh^T blocks
                   + 2 * 4 * H_pad * 4                            # bias block
                   + 2 * B_pad * H_pad * 4                        # h/c carries
                   + 4 * B_pad * H_pad * 4)                       # h_n/c_n out blocks
    per_step_bytes = B_pad * (2 * E_pad * mm_bytes                # x slab (double-buffered)
                              + 2 * H_pad * mm_bytes              # hist slab (double-buffered)
                              + 2 * 4 * H_pad * 4)                # xg scratch + matmul temp
    avail = int(vmem_limit * 0.7) - fixed_bytes
    t_by_budget = max(avail, 0) // per_step_bytes // t_tile * t_tile
    t_chunk = min(max(t_tile, t_by_budget), _round_up(T, t_tile))

    T_rec = _round_up(T, t_chunk)                # padded sequence length (tail guarded)
    num_chunks = T_rec // t_chunk

    # ---- padded / transposed weights (each gate block padded to H_pad lanes) -----------
    # Zero padding keeps the math exact: padded hidden columns get preactivation 0
    # -> i=f=o=0.5, g=0 -> c,h stay exactly 0 forever, and padded W rows/cols are 0.
    def gate_padded_T(w, in_dim):
        wt = jnp.zeros((_round_up(in_dim, 128), 4 * H_pad), f32)
        for g in range(4):
            wt = wt.at[:in_dim, g * H_pad:g * H_pad + H].set(
                jnp.transpose(w[g * H:(g + 1) * H, :]).astype(f32))
        return wt

    wih_t = gate_padded_T(w_ih, E).astype(matmul_dtype)        # (E_pad, 4*H_pad)
    whh_t = gate_padded_T(w_hh, H).astype(matmul_dtype)        # (H_pad, 4*H_pad)

    b_sum = (b_ih + b_hh).astype(f32)
    bias = jnp.zeros((1, 4 * H_pad), f32)
    for g in range(4):
        bias = bias.at[0, g * H_pad:g * H_pad + H].set(b_sum[g * H:(g + 1) * H])

    wout_t = (jnp.zeros((H_pad, V_pad), f32)
              .at[:H, :V].set(jnp.transpose(w_out).astype(f32))
              .astype(matmul_dtype))                            # (H_pad, V_pad)
    bout = jnp.zeros((1, V_pad), f32).at[0, :V].set(b_out.astype(f32))

    # ---- embedding gather: produced time-major directly (no activation transpose) ------
    ids_pad = jnp.zeros((B_pad, T), input_ids.dtype).at[:B, :].set(input_ids)
    emb_pad = jnp.zeros((V, E_pad), f32).at[:, :E].set(emb.astype(f32))
    x_tm = jnp.take(emb_pad, jnp.transpose(ids_pad), axis=0)        # (T, B_pad, E_pad)
    if T_rec != T:
        x_tm = jnp.pad(x_tm, ((0, T_rec - T), (0, 0), (0, 0)))      # zero tail steps
    x_tm = x_tm.astype(matmul_dtype)

    # ---- recurrence: grid over coarse T-chunks, lax.fori_loop over steps inside --------
    rec_cost = pl.CostEstimate(
        flops=int(T_rec * (2 * B_pad * E_pad * 4 * H_pad
                           + 2 * B_pad * H_pad * 4 * H_pad
                           + 10 * B_pad * H_pad)),
        transcendentals=int(T_rec * 5 * B_pad * H_pad),
        bytes_accessed=int(T_rec * B_pad * (E_pad + H_pad) * mm_bytes
                           + (E_pad + H_pad) * 4 * H_pad * mm_bytes
                           + 4 * H_pad * 4
                           + 2 * B_pad * H_pad * 4),
    )

    rec_kernel = functools.partial(_lstm_recurrence_kernel, t_chunk=t_chunk,
                                   h_pad=H_pad, seq_len=T, mm_dtype=matmul_dtype)

    # TODO(synk): on v7x (2 TensorCores) a leading "parallel" batch-block axis with
    # per-block h/c scratch would let both cores run the recurrence; omitted here.
    h_hist, h_n, c_n = pl.pallas_call(
        rec_kernel,
        out_shape=(
            jax.ShapeDtypeStruct((T_rec, B_pad, H_pad), matmul_dtype),  # full h history
            jax.ShapeDtypeStruct((B_pad, H_pad), f32),                  # h_T
            jax.ShapeDtypeStruct((B_pad, H_pad), f32),                  # c_T
        ),
        grid_spec=pltpu.PrefetchScalarGridSpec(
            num_scalar_prefetch=0,
            grid=(num_chunks,),
            in_specs=[
                pl.BlockSpec((t_chunk, B_pad, E_pad), lambda c: (c, 0, 0)),  # x slab
                pl.BlockSpec((E_pad, 4 * H_pad), lambda c: (0, 0)),          # W_ih^T (padded)
                pl.BlockSpec((H_pad, 4 * H_pad), lambda c: (0, 0)),          # W_hh^T (padded)
                pl.BlockSpec((1, 4 * H_pad), lambda c: (0, 0)),              # combined bias
            ],
            out_specs=[
                pl.BlockSpec((t_chunk, B_pad, H_pad), lambda c: (c, 0, 0)),  # h history
                pl.BlockSpec((B_pad, H_pad), lambda c: (0, 0)),              # h_n
                pl.BlockSpec((B_pad, H_pad), lambda c: (0, 0)),              # c_n
            ],
            scratch_shapes=[
                pltpu.VMEM((B_pad, H_pad), f32),                   # h carry (persists)
                pltpu.VMEM((B_pad, H_pad), f32),                   # c carry
                pltpu.VMEM((t_chunk, B_pad, 4 * H_pad), f32),      # hoisted x@W_ih + b
            ],
        ),
        compiler_params=pltpu.CompilerParams(
            dimension_semantics=("arbitrary",),            # sequential recurrence
            vmem_limit_bytes=vmem_limit,
        ),
        cost_estimate=rec_cost,
    )(x_tm, wih_t, whh_t, bias)

    # ---- deferred, batched vocab projection --------------------------------------------
    # Small (T,B,H) -> (B,T,H) reorder in glue (H_pad << V for real vocabs) — T is already
    # a multiple of t_tile so no extra pad pass is needed.
    # TODO(synk): fold this reorder into the recurrence kernel's history write to save
    # one HBM round-trip of the h history for very long sequences.
    h_bm = jnp.transpose(h_hist, (1, 0, 2))[:B]            # (B, T_rec, H_pad)

    v_tile = 128 * _largest_divisor_at_most(V_pad // 128, max(1, v_tile_cap // 128))

    proj_cost = pl.CostEstimate(
        flops=int(2 * B * T_rec * H_pad * V_pad),
        transcendentals=0,
        bytes_accessed=int(B * T_rec * H_pad * mm_bytes * (V_pad // v_tile)
                           + H_pad * V_pad * mm_bytes
                           + V_pad * 4
                           + B * T_rec * V_pad * 4),
    )

    logits_pad = pl.pallas_call(
        _vocab_projection_kernel,
        out_shape=jax.ShapeDtypeStruct((B, T_rec, V_pad), f32),
        grid_spec=pltpu.PrefetchScalarGridSpec(
            num_scalar_prefetch=0,
            # V-tile axis OUTERMOST: the (H_pad, v_tile) W_out block stays resident across
            # all (b, t-tile) iterations, so W_out is streamed from HBM only once.
            grid=(V_pad // v_tile, B, T_rec // t_tile),
            in_specs=[
                pl.BlockSpec((1, t_tile, H_pad), lambda vt, b, tt: (b, tt, 0)),
                pl.BlockSpec((H_pad, v_tile), lambda vt, b, tt: (0, vt)),
                pl.BlockSpec((1, v_tile), lambda vt, b, tt: (0, vt)),
            ],
            out_specs=pl.BlockSpec((1, t_tile, v_tile), lambda vt, b, tt: (b, tt, vt)),
        ),
        compiler_params=pltpu.CompilerParams(
            dimension_semantics=("parallel", "parallel", "parallel"),  # megacore-shardable
            vmem_limit_bytes=vmem_limit,
        ),
        cost_estimate=proj_cost,
    )(h_bm, wout_t, bout)

    logits = logits_pad[:, :T, :V]                                     # (B, T, V)
    hidden = (h_n[:B, :H][None, :, :], c_n[:B, :H][None, :, :])        # (num_layers=1, B, H)
    return logits, hidden


# ----------------------------------------------------------------------------
# Parameter init mirroring CharRNN._init_weights, and a pure-JAX reference.
# ----------------------------------------------------------------------------
def init_params(key, vocab_size, embedding_dim, hidden_dim):
    k_emb, k_ih, k_hh, k_out = jax.random.split(key, 4)

    def xavier_uniform(k, shape):
        fan_out, fan_in = shape
        limit = (6.0 / (fan_in + fan_out)) ** 0.5
        return jax.random.uniform(k, shape, jnp.float32, -limit, limit)

    return {
        "embedding": 0.02 * jax.random.normal(k_emb, (vocab_size, embedding_dim), jnp.float32),
        "w_ih": xavier_uniform(k_ih, (4 * hidden_dim, embedding_dim)),
        "w_hh": xavier_uniform(k_hh, (4 * hidden_dim, hidden_dim)),
        "b_ih": jnp.zeros((4 * hidden_dim,), jnp.float32),
        "b_hh": jnp.zeros((4 * hidden_dim,), jnp.float32),
        "w_out": 0.02 * jax.random.normal(k_out, (vocab_size, hidden_dim), jnp.float32),
        "b_out": jnp.zeros((vocab_size,), jnp.float32),
    }


def char_rnn_reference(input_ids, params):
    """Pure-JAX reference: embedding -> LSTM (batch_first) -> linear projection."""
    emb, w_ih, w_hh = params["embedding"], params["w_ih"], params["w_hh"]
    b = params["b_ih"] + params["b_hh"]
    w_out, b_out = params["w_out"], params["b_out"]
    H = w_hh.shape[1]
    B, _ = input_ids.shape
    hp = lax.Precision.HIGHEST
    x = jnp.take(emb, input_ids, axis=0)                        # (B, T, E)

    def step(carry, x_t):
        h, c = carry
        g = jnp.dot(x_t, w_ih.T, precision=hp) + jnp.dot(h, w_hh.T, precision=hp) + b
        i = jax.nn.sigmoid(g[:, 0 * H:1 * H])
        f = jax.nn.sigmoid(g[:, 1 * H:2 * H])
        gg = jnp.tanh(g[:, 2 * H:3 * H])
        o = jax.nn.sigmoid(g[:, 3 * H:4 * H])
        c = f * c + i * gg
        h = o * jnp.tanh(c)
        return (h, c), h

    init = (jnp.zeros((B, H), jnp.float32), jnp.zeros((B, H), jnp.float32))
    (h_T, c_T), hs = lax.scan(step, init, jnp.transpose(x, (1, 0, 2)))
    logits = jnp.dot(jnp.transpose(hs, (1, 0, 2)), w_out.T, precision=hp) + b_out
    return logits, (h_T[None], c_T[None])


if __name__ == "__main__":
    # Small shapes consistent with the module: vocab=64, emb=32, hidden=32, 1 layer.
    B, T = 2, 8
    VOCAB, EMB, HID = 64, 32, 32

    key = jax.random.PRNGKey(0)
    k_params, k_ids = jax.random.split(key)
    params = init_params(k_params, VOCAB, EMB, HID)
    input_ids = jax.random.randint(k_ids, (B, T), 0, VOCAB, dtype=jnp.int32)

    fwd_bf16 = jax.jit(functools.partial(char_rnn_forward, matmul_dtype=jnp.bfloat16))
    fwd_f32 = jax.jit(functools.partial(char_rnn_forward, matmul_dtype=jnp.float32))

    # Performance-default bf16 MXU path.
    logits, (h_n, c_n) = fwd_bf16(input_ids, params)
    jax.block_until_ready((logits, h_n, c_n))

    assert logits.shape == (B, T, VOCAB)
    assert h_n.shape == (1, B, HID) and c_n.shape == (1, B, HID)

    ref_logits, (ref_h, ref_c) = char_rnn_reference(input_ids, params)

    # bf16 path: dtype-appropriate (loose) tolerance — recurrent bf16 rounding compounds.
    assert jnp.allclose(logits, ref_logits, atol=2e-2, rtol=2e-2), \
        float(jnp.max(jnp.abs(logits - ref_logits)))
    assert jnp.allclose(h_n, ref_h, atol=2e-2, rtol=2e-2)
    assert jnp.allclose(c_n, ref_c, atol=2e-2, rtol=2e-2)

    # f32 path: tight tolerance against the pure-JAX reference.
    logits32, (h32, c32) = fwd_f32(input_ids, params)
    jax.block_until_ready((logits32, h32, c32))
    assert jnp.allclose(logits32, ref_logits, atol=1e-3, rtol=1e-3), \
        float(jnp.max(jnp.abs(logits32 - ref_logits)))
    assert jnp.allclose(h32, ref_h, atol=1e-3, rtol=1e-3)
    assert jnp.allclose(c32, ref_c, atol=1e-3, rtol=1e-3)

    print("KERNEL_OK")
</pallas_src>

<mosaic_0001>
module attributes {stable_mosaic.version = 11 : i64} {
  func.func @_lstm_recurrence_kernel(%arg0: i32, %arg1: memref<16x16x128xbf16, #tpu.memory_space<vmem>>, %arg2: memref<128x512xbf16, #tpu.memory_space<vmem>>, %arg3: memref<128x512xbf16, #tpu.memory_space<vmem>>, %arg4: memref<1x512xf32, #tpu.memory_space<vmem>>, %arg5: memref<16x16x128xbf16, #tpu.memory_space<vmem>>, %arg6: memref<16x128xf32, #tpu.memory_space<vmem>>, %arg7: memref<16x128xf32, #tpu.memory_space<vmem>>, %arg8: memref<16x128xf32, #tpu.memory_space<vmem>>, %arg9: memref<16x128xf32, #tpu.memory_space<vmem>>, %arg10: memref<16x16x512xf32, #tpu.memory_space<vmem>>) attributes {dimension_semantics = [#tpu.dimension_semantics<arbitrary>], iteration_bounds = array<i64: 1>, scalar_prefetch = 0 : i64, scratch_operands = 3 : i64, tpu.core_type = #tpu.core_type<tc>, window_params = [{transform_indices = @transform_0, window_bounds = array<i64: 16, 16, 128>}, {pipeline_mode = #tpu.pipeline_mode<synchronous>, transform_indices = @transform_1, window_bounds = array<i64: 128, 512>}, {pipeline_mode = #tpu.pipeline_mode<synchronous>, transform_indices = @transform_2, window_bounds = array<i64: 128, 512>}, {pipeline_mode = #tpu.pipeline_mode<synchronous>, transform_indices = @transform_3, window_bounds = array<i64: 1, 512>}, {transform_indices = @transform_4, window_bounds = array<i64: 16, 16, 128>}, {pipeline_mode = #tpu.pipeline_mode<synchronous>, transform_indices = @transform_5, window_bounds = array<i64: 16, 128>}, {pipeline_mode = #tpu.pipeline_mode<synchronous>, transform_indices = @transform_6, window_bounds = array<i64: 16, 128>}]} {
    %c0_i32 = arith.constant 0 : i32
    %0 = arith.cmpi eq, %arg0, %c0_i32 : i32
    %1 = arith.extui %0 : i1 to i32
    %c0_i32_0 = arith.constant 0 : i32
    %2 = arith.cmpi ne, %1, %c0_i32_0 : i32
    scf.if %2 {
      %cst_21 = arith.constant 0.000000e+00 : f32
      %18 = vector.broadcast %cst_21 : f32 to vector<16x128xf32>
      %c0_22 = arith.constant 0 : index
      %c0_23 = arith.constant 0 : index
      %19 = vector.load %arg8[%c0_22, %c0_23] : memref<16x128xf32, #tpu.memory_space<vmem>>, vector<16x128xf32>
      tpu.vector_store %arg8[%c0_22, %c0_23], %18 {strides = array<i32>} : memref<16x128xf32, #tpu.memory_space<vmem>>, vector<16x128xf32>,
      %cst_24 = arith.constant 0.000000e+00 : f32
      %20 = vector.broadcast %cst_24 : f32 to vector<16x128xf32>
      %c0_25 = arith.constant 0 : index
      %c0_26 = arith.constant 0 : index
      %21 = vector.load %arg9[%c0_25, %c0_26] : memref<16x128xf32, #tpu.memory_space<vmem>>, vector<16x128xf32>
      tpu.vector_store %arg9[%c0_25, %c0_26], %20 {strides = array<i32>} : memref<16x128xf32, #tpu.memory_space<vmem>>, vector<16x128xf32>,
    } else {
    }
    %c0 = arith.constant 0 : index
    %c0_1 = arith.constant 0 : index
    %c0_2 = arith.constant 0 : index
    %3 = vector.load %arg1[%c0, %c0_1, %c0_2] : memref<16x16x128xbf16, #tpu.memory_space<vmem>>, vector<16x16x128xbf16>
    %4 = vector.shape_cast %3 : vector<16x16x128xbf16> to vector<256x128xbf16>
    %c0_3 = arith.constant 0 : index
    %c0_4 = arith.constant 0 : index
    %5 = vector.load %arg2[%c0_3, %c0_4] : memref<128x512xbf16, #tpu.memory_space<vmem>>, vector<128x512xbf16>
    %cst = arith.constant dense<0.000000e+00> : vector<256x512xf32>
    %6 = tpu.matmul %4, %5, %cst {dimension_numbers = #tpu.dot_dimension_numbers<[1], [0], [0], [1], [0, 0, 1, 1], [], []>} : vector<256x128xbf16>, vector<128x512xbf16>, vector<256x512xf32> -> vector<256x512xf32>
    %c0_5 = arith.constant 0 : index
    %c0_6 = arith.constant 0 : index
    %7 = vector.load %arg4[%c0_5, %c0_6] : memref<1x512xf32, #tpu.memory_space<vmem>>, vector<1x512xf32>
    %8 = vector.broadcast %7 : vector<1x512xf32> to vector<256x512xf32>
    %9 = arith.addf %6, %8 : vector<256x512xf32>
    %10 = vector.shape_cast %9 : vector<256x512xf32> to vector<16x16x512xf32>
    %c0_7 = arith.constant 0 : index
    %c0_8 = arith.constant 0 : index
    %c0_9 = arith.constant 0 : index
    %11 = vector.load %arg10[%c0_7, %c0_8, %c0_9] : memref<16x16x512xf32, #tpu.memory_space<vmem>>, vector<16x16x512xf32>
    tpu.vector_store %arg10[%c0_7, %c0_8, %c0_9], %10 {strides = array<i32>} : memref<16x16x512xf32, #tpu.memory_space<vmem>>, vector<16x16x512xf32>,
    %c16_i32 = arith.constant 16 : i32
    %12 = arith.muli %arg0, %c16_i32 : i32
    %c0_i32_10 = arith.constant 0 : i32
    %c16_i32_11 = arith.constant 16 : i32
    %13 = arith.addi %c0_i32_10, %c16_i32_11 : i32
    %c1_i32 = arith.constant 1 : i32
    scf.for %arg11 = %c0_i32_10 to %13 step %c1_i32  : i32 {
      %c0_21 = arith.constant 0 : index
      %c0_22 = arith.constant 0 : index
      %18 = vector.load %arg8[%c0_21, %c0_22] : memref<16x128xf32, #tpu.memory_space<vmem>>, vector<16x128xf32>
      %c0_23 = arith.constant 0 : index
      %c0_24 = arith.constant 0 : index
      %19 = vector.load %arg9[%c0_23, %c0_24] : memref<16x128xf32, #tpu.memory_space<vmem>>, vector<16x128xf32>
      %20 = arith.index_cast %arg11 : i32 to index
      %c0_25 = arith.constant 0 : index
      %c0_26 = arith.constant 0 : index
      %21 = vector.load %arg10[%20, %c0_25, %c0_26] : memref<16x16x512xf32, #tpu.memory_space<vmem>>, vector<1x16x512xf32>
      %22 = vector.shape_cast %21 : vector<1x16x512xf32> to vector<16x512xf32>
      %23 = arith.truncf %18 : vector<16x128xf32> to vector<16x128xbf16>
      %c0_27 = arith.constant 0 : index
      %c0_28 = arith.constant 0 : index
      %24 = vector.load %arg3[%c0_27, %c0_28] : memref<128x512xbf16, #tpu.memory_space<vmem>>, vector<128x512xbf16>
      %cst_29 = arith.constant dense<0.000000e+00> : vector<16x512xf32>
      %25 = tpu.matmul %23, %24, %cst_29 {dimension_numbers = #tpu.dot_dimension_numbers<[1], [0], [0], [1], [0, 0, 1, 1], [], []>} : vector<16x128xbf16>, vector<128x512xbf16>, vector<16x512xf32> -> vector<16x512xf32>
      %26 = arith.addf %22, %25 : vector<16x512xf32>
      %27 = vector.extract_strided_slice %26 {offsets = [0, 0], sizes = [16, 128], strides = [1, 1]} : vector<16x512xf32> to vector<16x128xf32>
      %28 = arith.negf %27 : vector<16x128xf32>
      %29 = math.exp %28 : vector<16x128xf32>
      %cst_30 = arith.constant 1.000000e+00 : f32
      %30 = vector.broadcast %cst_30 : f32 to vector<16x128xf32>
      %31 = arith.addf %30, %29 : vector<16x128xf32>
      %32 = arith.divf %30, %31 : vector<16x128xf32>
      %33 = vector.extract_strided_slice %26 {offsets = [0, 128], sizes = [16, 128], strides = [1, 1]} : vector<16x512xf32> to vector<16x128xf32>
      %34 = arith.negf %33 : vector<16x128xf32>
      %35 = math.exp %34 : vector<16x128xf32>
      %cst_31 = arith.constant 1.000000e+00 : f32
      %36 = vector.broadcast %cst_31 : f32 to vector<16x128xf32>
      %37 = arith.addf %36, %35 : vector<16x128xf32>
      %38 = arith.divf %36, %37 : vector<16x128xf32>
      %39 = vector.extract_strided_slice %26 {offsets = [0, 256], sizes = [16, 128], strides = [1, 1]} : vector<16x512xf32> to vector<16x128xf32>
      %40 = math.tanh %39 : vector<16x128xf32>
      %41 = vector.extract_strided_slice %26 {offsets = [0, 384], sizes = [16, 128], strides = [1, 1]} : vector<16x512xf32> to vector<16x128xf32>
      %42 = arith.negf %41 : vector<16x128xf32>
      %43 = math.exp %42 : vector<16x128xf32>
      %cst_32 = arith.constant 1.000000e+00 : f32
      %44 = vector.broadcast %cst_32 : f32 to vector<16x128xf32>
      %45 = arith.addf %44, %43 : vector<16x128xf32>
      %46 = arith.divf %44, %45 : vector<16x128xf32>
      %47 = arith.mulf %38, %19 : vector<16x128xf32>
      %48 = arith.mulf %32, %40 : vector<16x128xf32>
      %49 = arith.addf %47, %48 : vector<16x128xf32>
      %50 = math.tanh %49 : vector<16x128xf32>
      %51 = arith.mulf %46, %50 : vector<16x128xf32>
      %52 = arith.truncf %51 : vector<16x128xf32> to vector<16x128xbf16>
      %53 = arith.index_cast %arg11 : i32 to index
      %c0_33 = arith.constant 0 : index
      %c0_34 = arith.constant 0 : index
      %54 = vector.load %arg5[%53, %c0_33, %c0_34] : memref<16x16x128xbf16, #tpu.memory_space<vmem>>, vector<1x16x128xbf16>
      %55 = vector.shape_cast %54 : vector<1x16x128xbf16> to vector<16x128xbf16>
      %56 = vector.shape_cast %52 : vector<16x128xbf16> to vector<1x16x128xbf16>
      tpu.vector_store %arg5[%53, %c0_33, %c0_34], %56 {strides = array<i32>} : memref<16x16x128xbf16, #tpu.memory_space<vmem>>, vector<1x16x128xbf16>,
      %57 = arith.addi %12, %arg11 : i32
      %c8_i32 = arith.constant 8 : i32
      %58 = arith.cmpi slt, %57, %c8_i32 : i32
      %59 = arith.extui %58 : i1 to i32
      %c0_i32_35 = arith.constant 0 : i32
      %60 = arith.cmpi ne, %59, %c0_i32_35 : i32
      scf.if %60 {
        %c0_36 = arith.constant 0 : index
        %c0_37 = arith.constant 0 : index
        %61 = vector.load %arg8[%c0_36, %c0_37] : memref<16x128xf32, #tpu.memory_space<vmem>>, vector<16x128xf32>
        tpu.vector_store %arg8[%c0_36, %c0_37], %51 {strides = array<i32>} : memref<16x128xf32, #tpu.memory_space<vmem>>, vector<16x128xf32>,
        %c0_38 = arith.constant 0 : index
        %c0_39 = arith.constant 0 : index
        %62 = vector.load %arg9[%c0_38, %c0_39] : memref<16x128xf32, #tpu.memory_space<vmem>>, vector<16x128xf32>
        tpu.vector_store %arg9[%c0_38, %c0_39], %49 {strides = array<i32>} : memref<16x128xf32, #tpu.memory_space<vmem>>, vector<16x128xf32>,
      } else {
      }
    }
    %c16_i32_12 = arith.constant 16 : i32
    %c0_13 = arith.constant 0 : index
    %c0_14 = arith.constant 0 : index
    %14 = vector.load %arg8[%c0_13, %c0_14] : memref<16x128xf32, #tpu.memory_space<vmem>>, vector<16x128xf32>
    %c0_15 = arith.constant 0 : index
    %c0_16 = arith.constant 0 : index
    %15 = vector.load %arg6[%c0_15, %c0_16] : memref<16x128xf32, #tpu.memory_space<vmem>>, vector<16x128xf32>
    tpu.vector_store %arg6[%c0_15, %c0_16], %14 {strides = array<i32>} : memref<16x128xf32, #tpu.memory_space<vmem>>, vector<16x128xf32>,
    %c0_17 = arith.constant 0 : index
    %c0_18 = arith.constant 0 : index
    %16 = vector.load %arg9[%c0_17, %c0_18] : memref<16x128xf32, #tpu.memory_space<vmem>>, vector<16x128xf32>
    %c0_19 = arith.constant 0 : index
    %c0_20 = arith.constant 0 : index
    %17 = vector.load %arg7[%c0_19, %c0_20] : memref<16x128xf32, #tpu.memory_space<vmem>>, vector<16x128xf32>
    tpu.vector_store %arg7[%c0_19, %c0_20], %16 {strides = array<i32>} : memref<16x128xf32, #tpu.memory_space<vmem>>, vector<16x128xf32>,
    return
  }
  func.func @transform_0(%arg0: i32) -> (i32, i32, i32) {
    %c0_i32 = arith.constant 0 : i32
    %c0_i32_0 = arith.constant 0 : i32
    %c0_i32_1 = arith.constant 0 : i32
    return %arg0, %c0_i32, %c0_i32_0 : i32, i32, i32
  }
  func.func @transform_1(%arg0: i32) -> (i32, i32) {
    %c0_i32 = arith.constant 0 : i32
    %c0_i32_0 = arith.constant 0 : i32
    %c0_i32_1 = arith.constant 0 : i32
    return %c0_i32, %c0_i32_0 : i32, i32
  }
  func.func @transform_2(%arg0: i32) -> (i32, i32) {
    %c0_i32 = arith.constant 0 : i32
    %c0_i32_0 = arith.constant 0 : i32
    %c0_i32_1 = arith.constant 0 : i32
    return %c0_i32, %c0_i32_0 : i32, i32
  }
  func.func @transform_3(%arg0: i32) -> (i32, i32) {
    %c0_i32 = arith.constant 0 : i32
    %c0_i32_0 = arith.constant 0 : i32
    %c0_i32_1 = arith.constant 0 : i32
    return %c0_i32, %c0_i32_0 : i32, i32
  }
  func.func @transform_4(%arg0: i32) -> (i32, i32, i32) {
    %c0_i32 = arith.constant 0 : i32
    %c0_i32_0 = arith.constant 0 : i32
    %c0_i32_1 = arith.constant 0 : i32
    return %arg0, %c0_i32, %c0_i32_0 : i32, i32, i32
  }
  func.func @transform_5(%arg0: i32) -> (i32, i32) {
    %c0_i32 = arith.constant 0 : i32
    %c0_i32_0 = arith.constant 0 : i32
    %c0_i32_1 = arith.constant 0 : i32
    return %c0_i32, %c0_i32_0 : i32, i32
  }
  func.func @transform_6(%arg0: i32) -> (i32, i32) {
    %c0_i32 = arith.constant 0 : i32
    %c0_i32_0 = arith.constant 0 : i32
    %c0_i32_1 = arith.constant 0 : i32
    return %c0_i32, %c0_i32_0 : i32, i32
  }
}

module attributes {stable_mosaic.version = 11 : i64} {
  func.func @_vocab_projection_kernel(%arg0: i32, %arg1: i32, %arg2: i32, %arg3: memref<1x16x128xbf16, #tpu.memory_space<vmem>>, %arg4: memref<128x128xbf16, #tpu.memory_space<vmem>>, %arg5: memref<1x128xf32, #tpu.memory_space<vmem>>, %arg6: memref<1x16x128xf32, #tpu.memory_space<vmem>>) attributes {dimension_semantics = [#tpu.dimension_semantics<parallel>, #tpu.dimension_semantics<parallel>, #tpu.dimension_semantics<parallel>], iteration_bounds = array<i64: 1, 2, 1>, scalar_prefetch = 0 : i64, scratch_operands = 0 : i64, tpu.core_type = #tpu.core_type<tc>, window_params = [{transform_indices = @transform_0, window_bounds = array<i64: 1, 16, 128>}, {transform_indices = @transform_1, window_bounds = array<i64: 128, 128>}, {transform_indices = @transform_2, window_bounds = array<i64: 1, 128>}, {transform_indices = @transform_3, window_bounds = array<i64: 1, 16, 128>}]} {
    %c0 = arith.constant 0 : index
    %c0_0 = arith.constant 0 : index
    %c0_1 = arith.constant 0 : index
    %0 = vector.load %arg3[%c0, %c0_0, %c0_1] : memref<1x16x128xbf16, #tpu.memory_space<vmem>>, vector<1x16x128xbf16>
    %1 = vector.shape_cast %0 : vector<1x16x128xbf16> to vector<16x128xbf16>
    %c0_2 = arith.constant 0 : index
    %c0_3 = arith.constant 0 : index
    %2 = vector.load %arg4[%c0_2, %c0_3] : memref<128x128xbf16, #tpu.memory_space<vmem>>, vector<128x128xbf16>
    %cst = arith.constant dense<0.000000e+00> : vector<16x128xf32>
    %3 = tpu.matmul %1, %2, %cst {dimension_numbers = #tpu.dot_dimension_numbers<[1], [0], [0], [1], [0, 0, 1, 1], [], []>} : vector<16x128xbf16>, vector<128x128xbf16>, vector<16x128xf32> -> vector<16x128xf32>
    %c0_4 = arith.constant 0 : index
    %c0_5 = arith.constant 0 : index
    %4 = vector.load %arg5[%c0_4, %c0_5] : memref<1x128xf32, #tpu.memory_space<vmem>>, vector<1x128xf32>
    %5 = vector.broadcast %4 : vector<1x128xf32> to vector<16x128xf32>
    %6 = arith.addf %3, %5 : vector<16x128xf32>
    %c0_6 = arith.constant 0 : index
    %c0_7 = arith.constant 0 : index
    %c0_8 = arith.constant 0 : index
    %7 = vector.load %arg6[%c0_6, %c0_7, %c0_8] : memref<1x16x128xf32, #tpu.memory_space<vmem>>, vector<1x16x128xf32>
    %8 = vector.shape_cast %7 : vector<1x16x128xf32> to vector<16x128xf32>
    %9 = vector.shape_cast %6 : vector<16x128xf32> to vector<1x16x128xf32>
    tpu.vector_store %arg6[%c0_6, %c0_7, %c0_8], %9 {strides = array<i32>} : memref<1x16x128xf32, #tpu.memory_space<vmem>>, vector<1x16x128xf32>,
    return
  }
  func.func @transform_0(%arg0: i32, %arg1: i32, %arg2: i32) -> (i32, i32, i32) {
    %c0_i32 = arith.constant 0 : i32
    %c0_i32_0 = arith.constant 0 : i32
    return %arg1, %arg2, %c0_i32 : i32, i32, i32
  }
  func.func @transform_1(%arg0: i32, %arg1: i32, %arg2: i32) -> (i32, i32) {
    %c0_i32 = arith.constant 0 : i32
    %c0_i32_0 = arith.constant 0 : i32
    return %c0_i32, %arg0 : i32, i32
  }
  func.func @transform_2(%arg0: i32, %arg1: i32, %arg2: i32) -> (i32, i32) {
    %c0_i32 = arith.constant 0 : i32
    %c0_i32_0 = arith.constant 0 : i32
    return %c0_i32, %arg0 : i32, i32
  }
  func.func @transform_3(%arg0: i32, %arg1: i32, %arg2: i32) -> (i32, i32, i32) {
    %c0_i32 = arith.constant 0 : i32
    return %arg1, %arg2, %arg0 : i32, i32, i32
  }
}

</mosaic_0001>

<llo_original>
// kernel: char_rnn_forward.3
$region0: #{char_rnn_forward.3}
  #allocation0 [shape = 'u32[]', space=smem, size = 0x4, offset = 0x4, fixed_abs, tag = 'smem constant byte address 0x4 - core index']
  #allocation1 [shape = 'u32[72,128]{1,0:T(1,128)}', space=vmem, size = 0x9000, scoped, tag = 'internal scratch']
  %s0 = inlined_call_operand.vmem [shape: bf16[2,16,128], index: 0, kind: input, shape index: {}]
  %s1 = inlined_call_operand.vmem [shape: bf16[128,128], index: 1, kind: input, shape index: {}]
  %s2 = inlined_call_operand.vmem [shape: f32[1,128], index: 2, kind: input, shape index: {}]
  %s3 = inlined_call_operand.vmem [shape: f32[2,16,128], index: 3, kind: output, shape index: {}]
  %s4 = sld [smem:[#allocation0]]
  $region45: #{char_rnn_forward.3} parent=0
    _
  %s6 = ssub.s32 1, %s4
  %s7 = scalar_select 0, %s6, %s4
  loop: start=0, step=1, limit=4
  $region2: #{char_rnn_forward.3} parent=0 // loop_pre_header
    _
  $region3: #{char_rnn_forward.3} parent=0 // loop_header
    %s9 = sphi 0, %s13
    %p10 = scmp.ge.s32.totalorder %s9, 4
    %s16 = sphi 0, %s35
    %s17 = sphi 0, %s31
    %s18 = sphi 0, %s27
    %s19 = sphi 0, %s16
    %s20 = sphi 0, %s17
    %s21 = sphi 0, %s18
    %s22 = sphi 0, %s19
    %s23 = sphi 0, %s20
    %s24 = sphi 0, %s21
    %s40 = sphi 0, %s42
    %s43 = sphi 0, %s40
    %s44 = sphi 0, %s43
    %s60 = sphi 0, %s44
    %s66 = sphi 0, %s68
    %s69 = sphi 0, %s66
    %s70 = sphi 0, %s69
    %s86 = sphi 0, %s70
    %s92 = sphi 0, %s94
    %s95 = sphi 0, %s92
    %s96 = sphi 0, %s95
    %s112 = sphi 0, %s96
    %s122 = sphi 0, %s124
    %s125 = sphi 0, %s122
    %s126 = sphi 0, %s125
    %s142 = sphi 0, %s126
  $region4: #{char_rnn_forward.3} parent=0 // loop_header_branch
    %12 = sbr.rel (%p10) target = $region8
  $region5: #{char_rnn_forward.3} parent=0 // loop_body
    %s14 = ssub.s32 %s9, 1
    %s15 = ssub.s32 %s9, 2
    %s25 = sadd.s32 1, %s18
    %p26 = scmp.ge.s32.totalorder %s25, 1
    %s27 = scalar_select %p26, 0, %s25
    %s28 = sadd.s32 1, %s17
    %s29 = scalar_select %p26, %s28, %s17
    %p30 = scmp.ge.s32.totalorder %s29, 2
    %s31 = scalar_select %p30, 0, %s29
    %s32 = sadd.s32 1, %s16
    %s33 = scalar_select %p30, %s32, %s16
    %p34 = scmp.ge.s32.totalorder %s33, 1
    %s35 = scalar_select %p34, 0, %s33
    %s36 = ssub.s32 %s17, %s31
    %s37 = ssub.s32 %s18, %s27
    %s38 = sor.u32 %s36, %s37
    %p39 = scmp.eq.s32.totalorder %s38, 0
    %s41 = sadd.s32 %s40, 1
    %s42 = scalar_select %p39, %s40, %s41
    %p45 = pneg %p39
    %p46 = scmp.eq.s32.totalorder %s9, 1
    %p47 = por %p45, %p46
    %p48 = scmp.ne.s32.totalorder %s40, %s43
    %p49 = scmp.eq.s32.totalorder %s9, 0
    %p50 = por %p48, %p49
    %p51 = scmp.ne.s32.totalorder %s40, %s43
    %p52 = scmp.eq.s32.totalorder %s14, 1
    %p53 = por %p51, %p52
    %p54 = scmp.ne.s32.totalorder %s43, %s44
    %p55 = scmp.eq.s32.totalorder %s14, 0
    %p56 = por %p54, %p55
    %p57 = scmp.ne.s32.totalorder %s43, %s44
    %p58 = scmp.eq.s32.totalorder %s15, 1
    %p59 = por %p57, %p58
    %p61 = scmp.ne.s32.totalorder %s44, %s60
    %p62 = scmp.eq.s32.totalorder %s15, 0
    %p63 = por %p61, %p62
    %s64 = ssub.s32 %s16, %s35
    %p65 = scmp.eq.s32.totalorder %s64, 0
    %s67 = sadd.s32 %s66, 1
    %s68 = scalar_select %p65, %s66, %s67
    %p71 = pneg %p65
    %p72 = scmp.eq.s32.totalorder %s9, 1
    %p73 = por %p71, %p72
    %p74 = scmp.ne.s32.totalorder %s66, %s69
    %p75 = scmp.eq.s32.totalorder %s9, 0
    %p76 = por %p74, %p75
    %p77 = scmp.ne.s32.totalorder %s66, %s69
    %p78 = scmp.eq.s32.totalorder %s14, 1
    %p79 = por %p77, %p78
    %p80 = scmp.ne.s32.totalorder %s69, %s70
    %p81 = scmp.eq.s32.totalorder %s14, 0
    %p82 = por %p80, %p81
    %p83 = scmp.ne.s32.totalorder %s69, %s70
    %p84 = scmp.eq.s32.totalorder %s15, 1
    %p85 = por %p83, %p84
    %p87 = scmp.ne.s32.totalorder %s70, %s86
    %p88 = scmp.eq.s32.totalorder %s15, 0
    %p89 = por %p87, %p88
    %s90 = ssub.s32 %s16, %s35
    %p91 = scmp.eq.s32.totalorder %s90, 0
    %s93 = sadd.s32 %s92, 1
    %s94 = scalar_select %p91, %s92, %s93
    %p97 = pneg %p91
    %p98 = scmp.eq.s32.totalorder %s9, 1
    %p99 = por %p97, %p98
    %p100 = scmp.ne.s32.totalorder %s92, %s95
    %p101 = scmp.eq.s32.totalorder %s9, 0
    %p102 = por %p100, %p101
    %p103 = scmp.ne.s32.totalorder %s92, %s95
    %p104 = scmp.eq.s32.totalorder %s14, 1
    %p105 = por %p103, %p104
    %p106 = scmp.ne.s32.totalorder %s95, %s96
    %p107 = scmp.eq.s32.totalorder %s14, 0
    %p108 = por %p106, %p107
    %p109 = scmp.ne.s32.totalorder %s95, %s96
    %p110 = scmp.eq.s32.totalorder %s15, 1
    %p111 = por %p109, %p110
    %p113 = scmp.ne.s32.totalorder %s96, %s112
    %p114 = scmp.eq.s32.totalorder %s15, 0
    %p115 = por %p113, %p114
    %s116 = ssub.s32 %s17, %s31
    %s117 = ssub.s32 %s18, %s27
    %s118 = sor.u32 %s116, %s117
    %s119 = ssub.s32 %s16, %s35
    %s120 = sor.u32 %s118, %s119
    %p121 = scmp.eq.s32.totalorder %s120, 0
    %s123 = sadd.s32 %s122, 1
    %s124 = scalar_select %p121, %s122, %s123
    %p127 = pneg %p121
    %p128 = scmp.eq.s32.totalorder %s9, 1
    %p129 = por %p127, %p128
    %p130 = scmp.ne.s32.totalorder %s122, %s125
    %p131 = scmp.eq.s32.totalorder %s9, 0
    %p132 = por %p130, %p131
    %p133 = scmp.ne.s32.totalorder %s122, %s125
    %p134 = scmp.eq.s32.totalorder %s14, 1
    %p135 = por %p133, %p134
    %p136 = scmp.ne.s32.totalorder %s125, %s126
    %p137 = scmp.eq.s32.totalorder %s14, 0
    %p138 = por %p136, %p137
    %p139 = scmp.ne.s32.totalorder %s125, %s126
    %p140 = scmp.eq.s32.totalorder %s15, 1
    %p141 = por %p139, %p140
    %p143 = scmp.ne.s32.totalorder %s126, %s142
    %p144 = scmp.eq.s32.totalorder %s15, 0
    %p145 = por %p143, %p144
    %p146 = scmp.le.s32.totalorder 1, %s9
    %p147 = scmp.lt.s32.totalorder %s9, 3
    %p148 = pnand %p146, %p147
    %p149 = pneg %p148
    // Predicated region
    $region9: #{char_rnn_forward.3} parent=5 // pred_check
      _
    $region10: #{char_rnn_forward.3} parent=5 // pred_check_branch
      %151 = sbr.rel (%p148) target = $region12
    $region11: #{char_rnn_forward.3} parent=5 // pred_region
      %s152 = ssub.s32 %s9, 1
      // Predicated region
      $region13: #{char_rnn_forward.3} parent=11 // pred_check
        %p153 = pneg %p82
      $region14: #{char_rnn_forward.3} parent=11 // pred_check_branch
        %155 = sbr.rel (%p153) target = $region16
      $region15: #{char_rnn_forward.3} parent=11 // pred_region
        %p156 = scmp.lt.s32.totalorder %s19, 0
        %s157 = scalar_select %p156, %s19, 0
        %s158 = smul.addr %s157, 4
        %s159 = scalar_lea.vmem %s1, %s158
      $region16: #{char_rnn_forward.3} parent=11 // pred_fallthru
        _
      // Predicated region
      $region17: #{char_rnn_forward.3} parent=11 // pred_check
        %p160 = pneg %p108
      $region18: #{char_rnn_forward.3} parent=11 // pred_check_branch
        %162 = sbr.rel (%p160) target = $region20
      $region19: #{char_rnn_forward.3} parent=11 // pred_region
        %p163 = scmp.lt.s32.totalorder %s19, 0
        %s164 = scalar_select %p163, %s19, 0
        %s165 = scalar_lea.vmem %s2, %s164
      $region20: #{char_rnn_forward.3} parent=11 // pred_fallthru
        _
    $region12: #{char_rnn_forward.3} parent=5 // pred_fallthru
      _
    %p166 = scmp.lt.s32.totalorder %s9, 2
    // Predicated region
    $region21: #{char_rnn_forward.3} parent=5 // pred_check
      %p167 = pneg %p166
    $region22: #{char_rnn_forward.3} parent=5 // pred_check_branch
      %169 = sbr.rel (%p167) target = $region24
    $region23: #{char_rnn_forward.3} parent=5 // pred_region
      // Predicated region
      $region25: #{char_rnn_forward.3} parent=23 // pred_check
        %p170 = pneg %p50
      $region26: #{char_rnn_forward.3} parent=23 // pred_check_branch
        %172 = sbr.rel (%p170) target = $region28
      $region27: #{char_rnn_forward.3} parent=23 // pred_region
        %s173 = smul.u32 2, %s18
        %p174 = scmp.lt.s32.totalorder %s17, 1
        %s175 = scalar_select %p174, %s17, 1
        %p176 = scmp.lt.s32.totalorder %s173, 1
        %s177 = scalar_select %p176, %s173, 1
        %s178 = smul.addr %s175, 2
        %s179 = sadd.s32 %s177, %s178
        %s180 = smul.addr %s179, 4
        %s181 = scalar_lea.vmem %s0, %s180
        %s182 = smul.u32 2, %s18
      $region28: #{char_rnn_forward.3} parent=23 // pred_fallthru
        _
    $region24: #{char_rnn_forward.3} parent=5 // pred_fallthru
      _
    %p183 = scmp.le.s32.totalorder 1, %s9
    %p184 = scmp.lt.s32.totalorder %s9, 3
    %p185 = pnand %p183, %p184
    %p186 = pneg %p185
    // Predicated region
    $region29: #{char_rnn_forward.3} parent=5 // pred_check
      _
    $region30: #{char_rnn_forward.3} parent=5 // pred_check_branch
      %188 = sbr.rel (%p185) target = $region32
    $region31: #{char_rnn_forward.3} parent=5 // pred_region
      %s189 = ssub.s32 %s9, 1
      %s190 = smul.u32 2, %s21
      %p191 = scmp.lt.s32.totalorder %s20, 1
      %s192 = scalar_select %p191, %s20, 1
      %p193 = scmp.lt.s32.totalorder %s190, 1
      %s194 = scalar_select %p193, %s190, 1
      %s195 = smul.addr %s192, 2
      %s196 = sadd.s32 %s194, %s195
      %s197 = smul.addr %s196, 4
      %s198 = scalar_lea.vmem %s0, %s197
      %p199 = pneg %p56
      %p200 = pneg %p53
      %p201 = scmp.lt.s32.totalorder %s19, 0
      %s202 = scalar_select %p201, %s19, 0
      %s203 = smul.addr %s202, 4
      %s204 = scalar_lea.vmem %s1, %s203
      %p205 = pneg %p82
      %p206 = pneg %p79
      %p207 = scmp.lt.s32.totalorder %s19, 0
      %s208 = scalar_select %p207, %s19, 0
      %s209 = scalar_lea.vmem %s2, %s208
      %p210 = pneg %p108
      %p211 = pneg %p105
      %p212 = pneg %p138
      %p213 = pneg %p135
      %s214 = smul.u32 2, %s21
      %p215 = scmp.lt.s32.totalorder %s20, 1
      %s216 = scalar_select %p215, %s20, 1
      %p217 = scmp.lt.s32.totalorder %s214, 1
      %s218 = scalar_select %p217, %s214, 1
      %p219 = scmp.lt.s32.totalorder %s19, 0
      %s220 = scalar_select %p219, %s19, 0
      %s221 = sadd.s32 %s220, %s218
      %s222 = smul.addr %s216, 2
      %s223 = sadd.s32 %s221, %s222
      %s224 = smul.addr %s223, 8
      %s225 = scalar_lea.vmem %s3, %s224
      %s226 = smul.u32 2, %s21
      %p227 = scmp.lt.s32.totalorder %s20, 1
      %s228 = scalar_select %p227, %s20, 1
      %p229 = scmp.lt.s32.totalorder %s226, 1
      %s230 = scalar_select %p229, %s226, 1
      %s231 = smul.addr %s228, 2
      %s232 = sadd.s32 %s230, %s231
      %s233 = smul.addr %s232, 4
      %s234 = scalar_lea.vmem %s0, %s233
      %s235 = smul.u32 2, %s21
      %p236 = scmp.lt.s32.totalorder %s19, 0
      %s237 = scalar_select %p236, %s19, 0
      %s238 = smul.addr %s237, 4
      %s239 = scalar_lea.vmem %s1, %s238
      %p240 = scmp.lt.s32.totalorder %s19, 0
      %s241 = scalar_select %p240, %s19, 0
      %s242 = scalar_lea.vmem %s2, %s241
      %s243 = smul.u32 2, %s21
      %p244 = scmp.lt.s32.totalorder %s20, 1
      %s245 = scalar_select %p244, %s20, 1
      %p246 = scmp.lt.s32.totalorder %s243, 1
      %s247 = scalar_select %p246, %s243, 1
      %p248 = scmp.lt.s32.totalorder %s19, 0
      %s249 = scalar_select %p248, %s19, 0
      %s250 = sadd.s32 %s249, %s247
      %s251 = smul.addr %s245, 2
      %s252 = sadd.s32 %s250, %s251
      %s253 = smul.addr %s252, 8
      %s254 = scalar_lea.vmem %s3, %s253
      %s255 = smul.u32 2, %s21
      %v256 = vld [vmem:[%s234] sm:$0xf]
      %v257 = vld [vmem:[%s234 + $0x4] sm:$0xf]
      %v258 = vld [vmem:[%s239] sm:$0xf]
      %v259 = vld [vmem:[%s239 + $0x4] sm:$0xf]
      %v260 = vld [vmem:[%s239 + $0x8] sm:$0xf]
      %v261 = vld [vmem:[%s239 + $0xc] sm:$0xf]
      %v262 = vld [vmem:[%s239 + $0x10] sm:$0xf]
      %v263 = vld [vmem:[%s239 + $0x14] sm:$0xf]
      %v264 = vld [vmem:[%s239 + $0x18] sm:$0xf]
      %v265 = vld [vmem:[%s239 + $0x1c] sm:$0xf]
      %v266 = vld [vmem:[%s239 + $0x20] sm:$0xf]
      %v267 = vld [vmem:[%s239 + $0x24] sm:$0xf]
      %v268 = vld [vmem:[%s239 + $0x28] sm:$0xf]
      %v269 = vld [vmem:[%s239 + $0x2c] sm:$0xf]
      %v270 = vld [vmem:[%s239 + $0x30] sm:$0xf]
      %v271 = vld [vmem:[%s239 + $0x34] sm:$0xf]
      %v272 = vld [vmem:[%s239 + $0x38] sm:$0xf]
      %v273 = vld [vmem:[%s239 + $0x3c] sm:$0xf]
      %v274 = vld [vmem:[%s242] sm:$0x1]
      %v276 = vperm.slane %v274, 0
      %v280 = vunpack.c.l.b16 %v256
      %v281 = vunpack.c.l.b16 %v257
      %v282 = vpack.c.b16 %v281, %v280
      %v300 = vunpack.c.l.b16 %v258
      %v301 = vunpack.c.l.b16 %v259
      %v302 = vunpack.c.l.b16 %v260
      %v303 = vunpack.c.l.b16 %v261
      %v304 = vunpack.c.l.b16 %v262
      %v305 = vunpack.c.l.b16 %v263
      %v306 = vunpack.c.l.b16 %v264
      %v307 = vunpack.c.l.b16 %v265
      %v308 = vunpack.c.l.b16 %v266
      %v309 = vunpack.c.l.b16 %v267
      %v310 = vunpack.c.l.b16 %v268
      %v311 = vunpack.c.l.b16 %v269
      %v312 = vunpack.c.l.b16 %v270
      %v313 = vunpack.c.l.b16 %v271
      %v314 = vunpack.c.l.b16 %v272
      %v315 = vunpack.c.l.b16 %v273
      %v316 = vpack.c.b16 %v301, %v300
      %v317 = vpack.c.b16 %v303, %v302
      %v318 = vpack.c.b16 %v305, %v304
      %v319 = vpack.c.b16 %v307, %v306
      %v320 = vpack.c.b16 %v309, %v308
      %v321 = vpack.c.b16 %v311, %v310
      %v322 = vpack.c.b16 %v313, %v312
      %v323 = vpack.c.b16 %v315, %v314
      %332 = vmatpush.bf16.msra.mxu0 %v323
      %333 = vmatpush.bf16.msra.mxu0 %v322
      %334 = vmatpush.bf16.msra.mxu0 %v321
      %335 = vmatpush.bf16.msra.mxu0 %v320
      %336 = vmatpush.bf16.msra.mxu0 %v319
      %337 = vmatpush.bf16.msra.mxu0 %v318
      %338 = vmatpush.bf16.msra.mxu0 %v317
      %339 = vmatpush.bf16.msra.mxu0 %v316
      %340 = vmatmul.bf16.gmra.mxu0 %v282
      %v341 = vpop.f32.mrf.mxu0
      %v342 = vadd.f32 %v276, %v341
      %v343 = vpop.f32.mrf.mxu0
      %v344 = vadd.f32 %v276, %v343
      %345 = vdwg.mxu0
      %346 = vst [vmem:[%s254] sm:$0xff] %v342
      %347 = vst [vmem:[%s254 + $0x8] sm:$0xff] %v344
      %s348 = smul.u32 2, %s21
      %p349 = scmp.lt.s32.totalorder %s20, 1
      %s350 = scalar_select %p349, %s20, 1
      %p351 = scmp.lt.s32.totalorder %s348, 1
      %s352 = scalar_select %p351, %s348, 1
      %p353 = scmp.lt.s32.totalorder %s19, 0
      %s354 = scalar_select %p353, %s19, 0
      %s355 = sadd.s32 %s354, %s352
      %s356 = smul.addr %s350, 2
      %s357 = sadd.s32 %s355, %s356
      %s358 = smul.addr %s357, 8
      %s359 = scalar_lea.vmem %s3, %s358
      // Predicated region
      $region33: #{char_rnn_forward.3} parent=31 // pred_check
        %p360 = pneg %p135
      $region34: #{char_rnn_forward.3} parent=31 // pred_check_branch
        %362 = sbr.rel (%p360) target = $region36
      $region35: #{char_rnn_forward.3} parent=31 // pred_region
        %s363 = smul.u32 2, %s21
      $region36: #{char_rnn_forward.3} parent=31 // pred_fallthru
        _
    $region32: #{char_rnn_forward.3} parent=5 // pred_fallthru
      _
    %p364 = scmp.le.s32.totalorder 2, %s9
    // Predicated region
    $region37: #{char_rnn_forward.3} parent=5 // pred_check
      %p365 = pneg %p364
    $region38: #{char_rnn_forward.3} parent=5 // pred_check_branch
      %367 = sbr.rel (%p365) target = $region40
    $region39: #{char_rnn_forward.3} parent=5 // pred_region
      %s368 = ssub.s32 %s9, 2
      // Predicated region
      $region41: #{char_rnn_forward.3} parent=39 // pred_check
        %p369 = pneg %p141
      $region42: #{char_rnn_forward.3} parent=39 // pred_check_branch
        %371 = sbr.rel (%p369) target = $region44
      $region43: #{char_rnn_forward.3} parent=39 // pred_region
        %s372 = smul.u32 2, %s24
        %p373 = scmp.lt.s32.totalorder %s23, 1
        %s374 = scalar_select %p373, %s23, 1
        %p375 = scmp.lt.s32.totalorder %s372, 1
        %s376 = scalar_select %p375, %s372, 1
        %p377 = scmp.lt.s32.totalorder %s22, 0
        %s378 = scalar_select %p377, %s22, 0
        %s379 = sadd.s32 %s378, %s376
        %s380 = smul.addr %s374, 2
        %s381 = sadd.s32 %s379, %s380
        %s382 = smul.addr %s381, 8
        %s383 = scalar_lea.vmem %s3, %s382
      $region44: #{char_rnn_forward.3} parent=39 // pred_fallthru
        _
    $region40: #{char_rnn_forward.3} parent=5 // pred_fallthru
      _
  $region6: #{char_rnn_forward.3} parent=0 // loop_footer
    %s13 = sadd.s32 1, %s9
  $region7: #{char_rnn_forward.3} parent=0 // loop_footer_branch
    %8 = sbr.rel target = $region3
  $region8: #{char_rnn_forward.3} parent=0 // loop_exit
    _

// kernel: char_rnn_forward.2
$region0: #{char_rnn_forward.2}
  #allocation0 [shape = 'u32[]', space=smem, size = 0x4, offset = 0x4, fixed_abs, tag = 'smem constant byte address 0x4 - core index']
  #allocation1 [shape = 'u32[72,128]{1,0:T(1,128)}', space=vmem, size = 0x9000, scoped, tag = 'internal scratch']
  #allocation2 [shape = 'f32[16,128]{1,0:T(8,128)}', space=vmem, size = 0x2000, scoped, tag = 'scratch operand']
  #allocation3 [shape = 'f32[16,128]{1,0:T(8,128)}', space=vmem, size = 0x2000, scoped, tag = 'scratch operand']
  #allocation4 [shape = 'f32[16,16,512]{2,1,0:T(8,128)}', space=vmem, size = 0x80000, scoped, tag = 'scratch operand']
  %s0 = inlined_call_operand.vmem [shape: bf16[16,16,128], index: 0, kind: input, shape index: {}]
  %s1 = inlined_call_operand.vmem [shape: bf16[128,512], index: 1, kind: input, shape index: {}]
  %s2 = inlined_call_operand.vmem [shape: bf16[128,512], index: 2, kind: input, shape index: {}]
  %s3 = inlined_call_operand.vmem [shape: f32[1,512], index: 3, kind: input, shape index: {}]
  %s4 = inlined_call_operand.vmem [shape: bf16[16,16,128], index: 4, kind: output, shape index: {0}]
  %s5 = inlined_call_operand.vmem [shape: f32[16,128], index: 5, kind: output, shape index: {1}]
  %s6 = inlined_call_operand.vmem [shape: f32[16,128], index: 6, kind: output, shape index: {2}]
  %7 = xla_tuple %s4, %s5, %s6
  %s8 = sld [smem:[#allocation0]]
  $region57: #{char_rnn_forward.2} parent=0
    _
  %s10 = ssub.s32 1, %s8
  %s11 = scalar_select 0, %s10, %s8
  // Predicated region
  $region2: #{char_rnn_forward.2} parent=0 // pred_check
    _
  $region3: #{char_rnn_forward.2} parent=0 // pred_check_branch
    %13 = sbr.rel (0) target = $region5
  $region4: #{char_rnn_forward.2} parent=0 // pred_region
    _
  $region5: #{char_rnn_forward.2} parent=0 // pred_fallthru
    _
  // Predicated region
  $region6: #{char_rnn_forward.2} parent=0 // pred_check
    _
  $region7: #{char_rnn_forward.2} parent=0 // pred_check_branch
    %15 = sbr.rel (0) target = $region9
  $region8: #{char_rnn_forward.2} parent=0 // pred_region
    _
  $region9: #{char_rnn_forward.2} parent=0 // pred_fallthru
    _
  // Predicated region
  $region10: #{char_rnn_forward.2} parent=0 // pred_check
    _
  $region11: #{char_rnn_forward.2} parent=0 // pred_check_branch
    %17 = sbr.rel (0) target = $region13
  $region12: #{char_rnn_forward.2} parent=0 // pred_region
    _
  $region13: #{char_rnn_forward.2} parent=0 // pred_fallthru
    _
  // Predicated region
  $region14: #{char_rnn_forward.2} parent=0 // pred_check
    _
  $region15: #{char_rnn_forward.2} parent=0 // pred_check_branch
    %19 = sbr.rel (0) target = $region17
  $region16: #{char_rnn_forward.2} parent=0 // pred_region
    _
  $region17: #{char_rnn_forward.2} parent=0 // pred_fallthru
    _
  %p20 = scmp.eq.s32.totalorder 0, 0
  // Predicated region
  $region18: #{char_rnn_forward.2} parent=0 // pred_check
    %p21 = pneg %p20
  $region19: #{char_rnn_forward.2} parent=0 // pred_check_branch
    %23 = sbr.rel (%p21) target = $region21
  $region20: #{char_rnn_forward.2} parent=0 // pred_region
    %24 = vst [vmem:[#allocation2] sm:$0xff] 0.0
    %25 = vst [vmem:[#allocation2 + $0x8] sm:$0xff] 0.0
    %26 = vst [vmem:[#allocation3] sm:$0xff] 0.0
    %27 = vst [vmem:[#allocation3 + $0x8] sm:$0xff] 0.0
  $region21: #{char_rnn_forward.2} parent=0 // pred_fallthru
    _
  %v28 = vld [vmem:[%s0] sm:$0xf]
  %v29 = vld [vmem:[%s0 + $0x4] sm:$0xf]
  %v30 = vld [vmem:[%s0 + $0x8] sm:$0xf]
  %v31 = vld [vmem:[%s0 + $0xc] sm:$0xf]
  %v32 = vld [vmem:[%s0 + $0x10] sm:$0xf]
  %v33 = vld [vmem:[%s0 + $0x14] sm:$0xf]
  %v34 = vld [vmem:[%s0 + $0x18] sm:$0xf]
  %v35 = vld [vmem:[%s0 + $0x1c] sm:$0xf]
  %v36 = vld [vmem:[%s0 + $0x20] sm:$0xf]
  %v37 = vld [vmem:[%s0 + $0x24] sm:$0xf]
  %v38 = vld [vmem:[%s0 + $0x28] sm:$0xf]
  %v39 = vld [vmem:[%s0 + $0x2c] sm:$0xf]
  %v40 = vld [vmem:[%s0 + $0x30] sm:$0xf]
  %v41 = vld [vmem:[%s0 + $0x34] sm:$0xf]
  %v42 = vld [vmem:[%s0 + $0x38] sm:$0xf]
  %v43 = vld [vmem:[%s0 + $0x3c] sm:$0xf]
  %v44 = vld [vmem:[%s0 + $0x40] sm:$0xf]
  %v45 = vld [vmem:[%s0 + $0x44] sm:$0xf]
  %v46 = vld [vmem:[%s0 + $0x48] sm:$0xf]
  %v47 = vld [vmem:[%s0 + $0x4c] sm:$0xf]
  %v48 = vld [vmem:[%s0 + $0x50] sm:$0xf]
  %v49 = vld [vmem:[%s0 + $0x54] sm:$0xf]
  %v50 = vld [vmem:[%s0 + $0x58] sm:$0xf]
  %v51 = vld [vmem:[%s0 + $0x5c] sm:$0xf]
  %v52 = vld [vmem:[%s0 + $0x60] sm:$0xf]
  %v53 = vld [vmem:[%s0 + $0x64] sm:$0xf]
  %v54 = vld [vmem:[%s0 + $0x68] sm:$0xf]
  %v55 = vld [vmem:[%s0 + $0x6c] sm:$0xf]
  %v56 = vld [vmem:[%s0 + $0x70] sm:$0xf]
  %v57 = vld [vmem:[%s0 + $0x74] sm:$0xf]
  %v58 = vld [vmem:[%s0 + $0x78] sm:$0xf]
  %v59 = vld [vmem:[%s0 + $0x7c] sm:$0xf]
  %v60 = vld [vmem:[%s1] sm:$0xff]
  %v61 = vld [vmem:[%s1 + $0x8] sm:$0xff]
  %v62 = vld [vmem:[%s1 + $0x10] sm:$0xff]
  %v63 = vld [vmem:[%s1 + $0x18] sm:$0xff]
  %v64 = vld [vmem:[%s1 + $0x20] sm:$0xff]
  %v65 = vld [vmem:[%s1 + $0x28] sm:$0xff]
  %v66 = vld [vmem:[%s1 + $0x30] sm:$0xff]
  %v67 = vld [vmem:[%s1 + $0x38] sm:$0xff]
  %v68 = vld [vmem:[%s1 + $0x40] sm:$0xff]
  %v69 = vld [vmem:[%s1 + $0x48] sm:$0xff]
  %v70 = vld [vmem:[%s1 + $0x50] sm:$0xff]
  %v71 = vld [vmem:[%s1 + $0x58] sm:$0xff]
  %v72 = vld [vmem:[%s1 + $0x60] sm:$0xff]
  %v73 = vld [vmem:[%s1 + $0x68] sm:$0xff]
  %v74 = vld [vmem:[%s1 + $0x70] sm:$0xff]
  %v75 = vld [vmem:[%s1 + $0x78] sm:$0xff]
  %v76 = vld [vmem:[%s1 + $0x80] sm:$0xff]
  %v77 = vld [vmem:[%s1 + $0x88] sm:$0xff]
  %v78 = vld [vmem:[%s1 + $0x90] sm:$0xff]
  %v79 = vld [vmem:[%s1 + $0x98] sm:$0xff]
  %v80 = vld [vmem:[%s1 + $0xa0] sm:$0xff]
  %v81 = vld [vmem:[%s1 + $0xa8] sm:$0xff]
  %v82 = vld [vmem:[%s1 + $0xb0] sm:$0xff]
  %v83 = vld [vmem:[%s1 + $0xb8] sm:$0xff]
  %v84 = vld [vmem:[%s1 + $0xc0] sm:$0xff]
  %v85 = vld [vmem:[%s1 + $0xc8] sm:$0xff]
  %v86 = vld [vmem:[%s1 + $0xd0] sm:$0xff]
  %v87 = vld [vmem:[%s1 + $0xd8] sm:$0xff]
  %v88 = vld [vmem:[%s1 + $0xe0] sm:$0xff]
  %v89 = vld [vmem:[%s1 + $0xe8] sm:$0xff]
  %v90 = vld [vmem:[%s1 + $0xf0] sm:$0xff]
  %v91 = vld [vmem:[%s1 + $0xf8] sm:$0xff]
  %v92 = vld [vmem:[%s3] sm:$0xf]
  %v94 = vperm.slane %v92, 0
  %v95 = vperm.slane %v92, 1
  %v96 = vperm.slane %v92, 2
  %v97 = vperm.slane %v92, 3
  %v134 = vunpack.c.l.b16 %v28
  %v135 = vunpack.c.l.b16 %v29
  %v136 = vunpack.c.l.b16 %v30
  %v137 = vunpack.c.l.b16 %v31
  %v138 = vunpack.c.l.b16 %v32
  %v139 = vunpack.c.l.b16 %v33
  %v140 = vunpack.c.l.b16 %v34
  %v141 = vunpack.c.l.b16 %v35
  %v142 = vunpack.c.l.b16 %v36
  %v143 = vunpack.c.l.b16 %v37
  %v144 = vunpack.c.l.b16 %v38
  %v145 = vunpack.c.l.b16 %v39
  %v146 = vunpack.c.l.b16 %v40
  %v147 = vunpack.c.l.b16 %v41
  %v148 = vunpack.c.l.b16 %v42
  %v149 = vunpack.c.l.b16 %v43
  %v150 = vunpack.c.l.b16 %v44
  %v151 = vunpack.c.l.b16 %v45
  %v152 = vunpack.c.l.b16 %v46
  %v153 = vunpack.c.l.b16 %v47
  %v154 = vunpack.c.l.b16 %v48
  %v155 = vunpack.c.l.b16 %v49
  %v156 = vunpack.c.l.b16 %v50
  %v157 = vunpack.c.l.b16 %v51
  %v158 = vunpack.c.l.b16 %v52
  %v159 = vunpack.c.l.b16 %v53
  %v160 = vunpack.c.l.b16 %v54
  %v161 = vunpack.c.l.b16 %v55
  %v162 = vunpack.c.l.b16 %v56
  %v163 = vunpack.c.l.b16 %v57
  %v164 = vunpack.c.l.b16 %v58
  %v165 = vunpack.c.l.b16 %v59
  %v166 = vpack.c.b16 %v135, %v134
  %v167 = vpack.c.b16 %v137, %v136
  %v168 = vpack.c.b16 %v139, %v138
  %v169 = vpack.c.b16 %v141, %v140
  %v170 = vpack.c.b16 %v143, %v142
  %v171 = vpack.c.b16 %v145, %v144
  %v172 = vpack.c.b16 %v147, %v146
  %v173 = vpack.c.b16 %v149, %v148
  %v174 = vpack.c.b16 %v151, %v150
  %v175 = vpack.c.b16 %v153, %v152
  %v176 = vpack.c.b16 %v155, %v154
  %v177 = vpack.c.b16 %v157, %v156
  %v178 = vpack.c.b16 %v159, %v158
  %v179 = vpack.c.b16 %v161, %v160
  %v180 = vpack.c.b16 %v163, %v162
  %v181 = vpack.c.b16 %v165, %v164
  %v230 = vunpack.c.l.b16 %v60
  %v231 = vunpack.c.h.b16 %v60
  %v232 = vunpack.c.l.b16 %v61
  %v233 = vunpack.c.h.b16 %v61
  %v234 = vunpack.c.l.b16 %v62
  %v235 = vunpack.c.h.b16 %v62
  %v236 = vunpack.c.l.b16 %v63
  %v237 = vunpack.c.h.b16 %v63
  %v238 = vunpack.c.l.b16 %v64
  %v239 = vunpack.c.h.b16 %v64
  %v240 = vunpack.c.l.b16 %v65
  %v241 = vunpack.c.h.b16 %v65
  %v242 = vunpack.c.l.b16 %v66
  %v243 = vunpack.c.h.b16 %v66
  %v244 = vunpack.c.l.b16 %v67
  %v245 = vunpack.c.h.b16 %v67
  %v246 = vunpack.c.l.b16 %v68
  %v247 = vunpack.c.h.b16 %v68
  %v248 = vunpack.c.l.b16 %v69
  %v249 = vunpack.c.h.b16 %v69
  %v250 = vunpack.c.l.b16 %v70
  %v251 = vunpack.c.h.b16 %v70
  %v252 = vunpack.c.l.b16 %v71
  %v253 = vunpack.c.h.b16 %v71
  %v254 = vunpack.c.l.b16 %v72
  %v255 = vunpack.c.h.b16 %v72
  %v256 = vunpack.c.l.b16 %v73
  %v257 = vunpack.c.h.b16 %v73
  %v258 = vunpack.c.l.b16 %v74
  %v259 = vunpack.c.h.b16 %v74
  %v260 = vunpack.c.l.b16 %v75
  %v261 = vunpack.c.h.b16 %v75
  %v262 = vunpack.c.l.b16 %v76
  %v263 = vunpack.c.h.b16 %v76
  %v264 = vunpack.c.l.b16 %v77
  %v265 = vunpack.c.h.b16 %v77
  %v266 = vunpack.c.l.b16 %v78
  %v267 = vunpack.c.h.b16 %v78
  %v268 = vunpack.c.l.b16 %v79
  %v269 = vunpack.c.h.b16 %v79
  %v270 = vunpack.c.l.b16 %v80
  %v271 = vunpack.c.h.b16 %v80
  %v272 = vunpack.c.l.b16 %v81
  %v273 = vunpack.c.h.b16 %v81
  %v274 = vunpack.c.l.b16 %v82
  %v275 = vunpack.c.h.b16 %v82
  %v276 = vunpack.c.l.b16 %v83
  %v277 = vunpack.c.h.b16 %v83
  %v278 = vunpack.c.l.b16 %v84
  %v279 = vunpack.c.h.b16 %v84
  %v280 = vunpack.c.l.b16 %v85
  %v281 = vunpack.c.h.b16 %v85
  %v282 = vunpack.c.l.b16 %v86
  %v283 = vunpack.c.h.b16 %v86
  %v284 = vunpack.c.l.b16 %v87
  %v285 = vunpack.c.h.b16 %v87
  %v286 = vunpack.c.l.b16 %v88
  %v287 = vunpack.c.h.b16 %v88
  %v288 = vunpack.c.l.b16 %v89
  %v289 = vunpack.c.h.b16 %v89
  %v290 = vunpack.c.l.b16 %v90
  %v291 = vunpack.c.h.b16 %v90
  %v292 = vunpack.c.l.b16 %v91
  %v293 = vunpack.c.h.b16 %v91
  %v294 = vpack.c.b16 %v234, %v230
  %v295 = vpack.c.b16 %v235, %v231
  %v296 = vpack.c.b16 %v236, %v232
  %v297 = vpack.c.b16 %v237, %v233
  %v298 = vpack.c.b16 %v242, %v238
  %v299 = vpack.c.b16 %v243, %v239
  %v300 = vpack.c.b16 %v244, %v240
  %v301 = vpack.c.b16 %v245, %v241
  %v302 = vpack.c.b16 %v250, %v246
  %v303 = vpack.c.b16 %v251, %v247
  %v304 = vpack.c.b16 %v252, %v248
  %v305 = vpack.c.b16 %v253, %v249
  %v306 = vpack.c.b16 %v258, %v254
  %v307 = vpack.c.b16 %v259, %v255
  %v308 = vpack.c.b16 %v260, %v256
  %v309 = vpack.c.b16 %v261, %v257
  %v310 = vpack.c.b16 %v266, %v262
  %v311 = vpack.c.b16 %v267, %v263
  %v312 = vpack.c.b16 %v268, %v264
  %v313 = vpack.c.b16 %v269, %v265
  %v314 = vpack.c.b16 %v274, %v270
  %v315 = vpack.c.b16 %v275, %v271
  %v316 = vpack.c.b16 %v276, %v272
  %v317 = vpack.c.b16 %v277, %v273
  %v318 = vpack.c.b16 %v282, %v278
  %v319 = vpack.c.b16 %v283, %v279
  %v320 = vpack.c.b16 %v284, %v280
  %v321 = vpack.c.b16 %v285, %v281
  %v322 = vpack.c.b16 %v290, %v286
  %v323 = vpack.c.b16 %v291, %v287
  %v324 = vpack.c.b16 %v292, %v288
  %v325 = vpack.c.b16 %v293, %v289
  %358 = vmatpush.bf16.msra.mxu0 %v322
  %359 = vmatpush.bf16.msra.mxu0 %v318
  %360 = vmatpush.bf16.msra.mxu0 %v314
  %361 = vmatpush.bf16.msra.mxu0 %v310
  %362 = vmatpush.bf16.msra.mxu0 %v306
  %363 = vmatpush.bf16.msra.mxu0 %v302
  %364 = vmatpush.bf16.msra.mxu0 %v298
  %365 = vmatpush.bf16.msra.mxu0 %v294
  %366 = vmatmul.bf16.gmra.mxu0 %v166
  %v367 = vpop.f32.mrf.mxu0
  %v368 = vadd.f32 %v94, %v367
  %v369 = vpop.f32.mrf.mxu0
  %v370 = vadd.f32 %v94, %v369
  %371 = vmatmul.bf16.gmra.mxu0 %v167
  %v372 = vpop.f32.mrf.mxu0
  %v373 = vadd.f32 %v94, %v372
  %v374 = vpop.f32.mrf.mxu0
  %v375 = vadd.f32 %v94, %v374
  %376 = vmatmul.bf16.gmra.mxu0 %v168
  %v377 = vpop.f32.mrf.mxu0
  %v378 = vadd.f32 %v94, %v377
  %v379 = vpop.f32.mrf.mxu0
  %v380 = vadd.f32 %v94, %v379
  %381 = vmatmul.bf16.gmra.mxu0 %v169
  %v382 = vpop.f32.mrf.mxu0
  %v383 = vadd.f32 %v94, %v382
  %v384 = vpop.f32.mrf.mxu0
  %v385 = vadd.f32 %v94, %v384
  %386 = vmatmul.bf16.gmra.mxu0 %v170
  %v387 = vpop.f32.mrf.mxu0
  %v388 = vadd.f32 %v94, %v387
  %v389 = vpop.f32.mrf.mxu0
  %v390 = vadd.f32 %v94, %v389
  %391 = vmatmul.bf16.gmra.mxu0 %v171
  %v392 = vpop.f32.mrf.mxu0
  %v393 = vadd.f32 %v94, %v392
  %v394 = vpop.f32.mrf.mxu0
  %v395 = vadd.f32 %v94, %v394
  %396 = vmatmul.bf16.gmra.mxu0 %v172
  %v397 = vpop.f32.mrf.mxu0
  %v398 = vadd.f32 %v94, %v397
  %v399 = vpop.f32.mrf.mxu0
  %v400 = vadd.f32 %v94, %v399
  %401 = vmatmul.bf16.gmra.mxu0 %v173
  %v402 = vpop.f32.mrf.mxu0
  %v403 = vadd.f32 %v94, %v402
  %v404 = vpop.f32.mrf.mxu0
  %v405 = vadd.f32 %v94, %v404
  %406 = vmatmul.bf16.gmra.mxu0 %v174
  %v407 = vpop.f32.mrf.mxu0
  %v408 = vadd.f32 %v94, %v407
  %v409 = vpop.f32.mrf.mxu0
  %v410 = vadd.f32 %v94, %v409
  %411 = vmatmul.bf16.gmra.mxu0 %v175
  %v412 = vpop.f32.mrf.mxu0
  %v413 = vadd.f32 %v94, %v412
  %v414 = vpop.f32.mrf.mxu0
  %v415 = vadd.f32 %v94, %v414
  %416 = vmatmul.bf16.gmra.mxu0 %v176
  %v417 = vpop.f32.mrf.mxu0
  %v418 = vadd.f32 %v94, %v417
  %v419 = vpop.f32.mrf.mxu0
  %v420 = vadd.f32 %v94, %v419
  %421 = vmatmul.bf16.gmra.mxu0 %v177
  %v422 = vpop.f32.mrf.mxu0
  %v423 = vadd.f32 %v94, %v422
  %v424 = vpop.f32.mrf.mxu0
  %v425 = vadd.f32 %v94, %v424
  %426 = vmatmul.bf16.gmra.mxu0 %v178
  %v427 = vpop.f32.mrf.mxu0
  %v428 = vadd.f32 %v94, %v427
  %v429 = vpop.f32.mrf.mxu0
  %v430 = vadd.f32 %v94, %v429
  %431 = vmatmul.bf16.gmra.mxu0 %v179
  %v432 = vpop.f32.mrf.mxu0
  %v433 = vadd.f32 %v94, %v432
  %v434 = vpop.f32.mrf.mxu0
  %v435 = vadd.f32 %v94, %v434
  %436 = vmatmul.bf16.gmra.mxu0 %v180
  %v437 = vpop.f32.mrf.mxu0
  %v438 = vadd.f32 %v94, %v437
  %v439 = vpop.f32.mrf.mxu0
  %v440 = vadd.f32 %v94, %v439
  %441 = vmatmul.bf16.gmra.mxu0 %v181
  %v442 = vpop.f32.mrf.mxu0
  %v443 = vadd.f32 %v94, %v442
  %v444 = vpop.f32.mrf.mxu0
  %v445 = vadd.f32 %v94, %v444
  %446 = vdwg.mxu0
  %447 = vmatpush.bf16.msra.mxu0 %v323
  %448 = vmatpush.bf16.msra.mxu0 %v319
  %449 = vmatpush.bf16.msra.mxu0 %v315
  %450 = vmatpush.bf16.msra.mxu0 %v311
  %451 = vmatpush.bf16.msra.mxu0 %v307
  %452 = vmatpush.bf16.msra.mxu0 %v303
  %453 = vmatpush.bf16.msra.mxu0 %v299
  %454 = vmatpush.bf16.msra.mxu0 %v295
  %455 = vmatmul.bf16.gmra.mxu0 %v166
  %v456 = vpop.f32.mrf.mxu0
  %v457 = vadd.f32 %v95, %v456
  %v458 = vpop.f32.mrf.mxu0
  %v459 = vadd.f32 %v95, %v458
  %460 = vmatmul.bf16.gmra.mxu0 %v167
  %v461 = vpop.f32.mrf.mxu0
  %v462 = vadd.f32 %v95, %v461
  %v463 = vpop.f32.mrf.mxu0
  %v464 = vadd.f32 %v95, %v463
  %465 = vmatmul.bf16.gmra.mxu0 %v168
  %v466 = vpop.f32.mrf.mxu0
  %v467 = vadd.f32 %v95, %v466
  %v468 = vpop.f32.mrf.mxu0
  %v469 = vadd.f32 %v95, %v468
  %470 = vmatmul.bf16.gmra.mxu0 %v169
  %v471 = vpop.f32.mrf.mxu0
  %v472 = vadd.f32 %v95, %v471
  %v473 = vpop.f32.mrf.mxu0
  %v474 = vadd.f32 %v95, %v473
  %475 = vmatmul.bf16.gmra.mxu0 %v170
  %v476 = vpop.f32.mrf.mxu0
  %v477 = vadd.f32 %v95, %v476
  %v478 = vpop.f32.mrf.mxu0
  %v479 = vadd.f32 %v95, %v478
  %480 = vmatmul.bf16.gmra.mxu0 %v171
  %v481 = vpop.f32.mrf.mxu0
  %v482 = vadd.f32 %v95, %v481
  %v483 = vpop.f32.mrf.mxu0
  %v484 = vadd.f32 %v95, %v483
  %485 = vmatmul.bf16.gmra.mxu0 %v172
  %v486 = vpop.f32.mrf.mxu0
  %v487 = vadd.f32 %v95, %v486
  %v488 = vpop.f32.mrf.mxu0
  %v489 = vadd.f32 %v95, %v488
  %490 = vmatmul.bf16.gmra.mxu0 %v173
  %v491 = vpop.f32.mrf.mxu0
  %v492 = vadd.f32 %v95, %v491
  %v493 = vpop.f32.mrf.mxu0
  %v494 = vadd.f32 %v95, %v493
  %495 = vmatmul.bf16.gmra.mxu0 %v174
  %v496 = vpop.f32.mrf.mxu0
  %v497 = vadd.f32 %v95, %v496
  %v498 = vpop.f32.mrf.mxu0
  %v499 = vadd.f32 %v95, %v498
  %500 = vmatmul.bf16.gmra.mxu0 %v175
  %v501 = vpop.f32.mrf.mxu0
  %v502 = vadd.f32 %v95, %v501
  %v503 = vpop.f32.mrf.mxu0
  %v504 = vadd.f32 %v95, %v503
  %505 = vmatmul.bf16.gmra.mxu0 %v176
  %v506 = vpop.f32.mrf.mxu0
  %v507 = vadd.f32 %v95, %v506
  %v508 = vpop.f32.mrf.mxu0
  %v509 = vadd.f32 %v95, %v508
  %510 = vmatmul.bf16.gmra.mxu0 %v177
  %v511 = vpop.f32.mrf.mxu0
  %v512 = vadd.f32 %v95, %v511
  %v513 = vpop.f32.mrf.mxu0
  %v514 = vadd.f32 %v95, %v513
  %515 = vmatmul.bf16.gmra.mxu0 %v178
  %v516 = vpop.f32.mrf.mxu0
  %v517 = vadd.f32 %v95, %v516
  %v518 = vpop.f32.mrf.mxu0
  %v519 = vadd.f32 %v95, %v518
  %520 = vmatmul.bf16.gmra.mxu0 %v179
  %v521 = vpop.f32.mrf.mxu0
  %v522 = vadd.f32 %v95, %v521
  %v523 = vpop.f32.mrf.mxu0
  %v524 = vadd.f32 %v95, %v523
  %525 = vmatmul.bf16.gmra.mxu0 %v180
  %v526 = vpop.f32.mrf.mxu0
  %v527 = vadd.f32 %v95, %v526
  %v528 = vpop.f32.mrf.mxu0
  %v529 = vadd.f32 %v95, %v528
  %530 = vmatmul.bf16.gmra.mxu0 %v181
  %v531 = vpop.f32.mrf.mxu0
  %v532 = vadd.f32 %v95, %v531
  %v533 = vpop.f32.mrf.mxu0
  %v534 = vadd.f32 %v95, %v533
  %535 = vdwg.mxu0
  %536 = vmatpush.bf16.msra.mxu0 %v324
  %537 = vmatpush.bf16.msra.mxu0 %v320
  %538 = vmatpush.bf16.msra.mxu0 %v316
  %539 = vmatpush.bf16.msra.mxu0 %v312
  %540 = vmatpush.bf16.msra.mxu0 %v308
  %541 = vmatpush.bf16.msra.mxu0 %v304
  %542 = vmatpush.bf16.msra.mxu0 %v300
  %543 = vmatpush.bf16.msra.mxu0 %v296
  %544 = vmatmul.bf16.gmra.mxu0 %v166
  %v545 = vpop.f32.mrf.mxu0
  %v546 = vadd.f32 %v96, %v545
  %v547 = vpop.f32.mrf.mxu0
  %v548 = vadd.f32 %v96, %v547
  %549 = vmatmul.bf16.gmra.mxu0 %v167
  %v550 = vpop.f32.mrf.mxu0
  %v551 = vadd.f32 %v96, %v550
  %v552 = vpop.f32.mrf.mxu0
  %v553 = vadd.f32 %v96, %v552
  %554 = vmatmul.bf16.gmra.mxu0 %v168
  %v555 = vpop.f32.mrf.mxu0
  %v556 = vadd.f32 %v96, %v555
  %v557 = vpop.f32.mrf.mxu0
  %v558 = vadd.f32 %v96, %v557
  %559 = vmatmul.bf16.gmra.mxu0 %v169
  %v560 = vpop.f32.mrf.mxu0
  %v561 = vadd.f32 %v96, %v560
  %v562 = vpop.f32.mrf.mxu0
  %v563 = vadd.f32 %v96, %v562
  %564 = vmatmul.bf16.gmra.mxu0 %v170
  %v565 = vpop.f32.mrf.mxu0
  %v566 = vadd.f32 %v96, %v565
  %v567 = vpop.f32.mrf.mxu0
  %v568 = vadd.f32 %v96, %v567
  %569 = vmatmul.bf16.gmra.mxu0 %v171
  %v570 = vpop.f32.mrf.mxu0
  %v571 = vadd.f32 %v96, %v570
  %v572 = vpop.f32.mrf.mxu0
  %v573 = vadd.f32 %v96, %v572
  %574 = vmatmul.bf16.gmra.mxu0 %v172
  %v575 = vpop.f32.mrf.mxu0
  %v576 = vadd.f32 %v96, %v575
  %v577 = vpop.f32.mrf.mxu0
  %v578 = vadd.f32 %v96, %v577
  %579 = vmatmul.bf16.gmra.mxu0 %v173
  %v580 = vpop.f32.mrf.mxu0
  %v581 = vadd.f32 %v96, %v580
  %v582 = vpop.f32.mrf.mxu0
  %v583 = vadd.f32 %v96, %v582
  %584 = vmatmul.bf16.gmra.mxu0 %v174
  %v585 = vpop.f32.mrf.mxu0
  %v586 = vadd.f32 %v96, %v585
  %v587 = vpop.f32.mrf.mxu0
  %v588 = vadd.f32 %v96, %v587
  %589 = vmatmul.bf16.gmra.mxu0 %v175
  %v590 = vpop.f32.mrf.mxu0
  %v591 = vadd.f32 %v96, %v590
  %v592 = vpop.f32.mrf.mxu0
  %v593 = vadd.f32 %v96, %v592
  %594 = vmatmul.bf16.gmra.mxu0 %v176
  %v595 = vpop.f32.mrf.mxu0
  %v596 = vadd.f32 %v96, %v595
  %v597 = vpop.f32.mrf.mxu0
  %v598 = vadd.f32 %v96, %v597
  %599 = vmatmul.bf16.gmra.mxu0 %v177
  %v600 = vpop.f32.mrf.mxu0
  %v601 = vadd.f32 %v96, %v600
  %v602 = vpop.f32.mrf.mxu0
  %v603 = vadd.f32 %v96, %v602
  %604 = vmatmul.bf16.gmra.mxu0 %v178
  %v605 = vpop.f32.mrf.mxu0
  %v606 = vadd.f32 %v96, %v605
  %v607 = vpop.f32.mrf.mxu0
  %v608 = vadd.f32 %v96, %v607
  %609 = vmatmul.bf16.gmra.mxu0 %v179
  %v610 = vpop.f32.mrf.mxu0
  %v611 = vadd.f32 %v96, %v610
  %v612 = vpop.f32.mrf.mxu0
  %v613 = vadd.f32 %v96, %v612
  %614 = vmatmul.bf16.gmra.mxu0 %v180
  %v615 = vpop.f32.mrf.mxu0
  %v616 = vadd.f32 %v96, %v615
  %v617 = vpop.f32.mrf.mxu0
  %v618 = vadd.f32 %v96, %v617
  %619 = vmatmul.bf16.gmra.mxu0 %v181
  %v620 = vpop.f32.mrf.mxu0
  %v621 = vadd.f32 %v96, %v620
  %v622 = vpop.f32.mrf.mxu0
  %v623 = vadd.f32 %v96, %v622
  %624 = vdwg.mxu0
  %625 = vmatpush.bf16.msra.mxu0 %v325
  %626 = vmatpush.bf16.msra.mxu0 %v321
  %627 = vmatpush.bf16.msra.mxu0 %v317
  %628 = vmatpush.bf16.msra.mxu0 %v313
  %629 = vmatpush.bf16.msra.mxu0 %v309
  %630 = vmatpush.bf16.msra.mxu0 %v305
  %631 = vmatpush.bf16.msra.mxu0 %v301
  %632 = vmatpush.bf16.msra.mxu0 %v297
  %633 = vmatmul.bf16.gmra.mxu0 %v166
  %v634 = vpop.f32.mrf.mxu0
  %v635 = vadd.f32 %v97, %v634
  %v636 = vpop.f32.mrf.mxu0
  %v637 = vadd.f32 %v97, %v636
  %638 = vmatmul.bf16.gmra.mxu0 %v167
  %v639 = vpop.f32.mrf.mxu0
  %v640 = vadd.f32 %v97, %v639
  %v641 = vpop.f32.mrf.mxu0
  %v642 = vadd.f32 %v97, %v641
  %643 = vmatmul.bf16.gmra.mxu0 %v168
  %v644 = vpop.f32.mrf.mxu0
  %v645 = vadd.f32 %v97, %v644
  %v646 = vpop.f32.mrf.mxu0
  %v647 = vadd.f32 %v97, %v646
  %648 = vmatmul.bf16.gmra.mxu0 %v169
  %v649 = vpop.f32.mrf.mxu0
  %v650 = vadd.f32 %v97, %v649
  %v651 = vpop.f32.mrf.mxu0
  %v652 = vadd.f32 %v97, %v651
  %653 = vmatmul.bf16.gmra.mxu0 %v170
  %v654 = vpop.f32.mrf.mxu0
  %v655 = vadd.f32 %v97, %v654
  %v656 = vpop.f32.mrf.mxu0
  %v657 = vadd.f32 %v97, %v656
  %658 = vmatmul.bf16.gmra.mxu0 %v171
  %v659 = vpop.f32.mrf.mxu0
  %v660 = vadd.f32 %v97, %v659
  %v661 = vpop.f32.mrf.mxu0
  %v662 = vadd.f32 %v97, %v661
  %663 = vmatmul.bf16.gmra.mxu0 %v172
  %v664 = vpop.f32.mrf.mxu0
  %v665 = vadd.f32 %v97, %v664
  %v666 = vpop.f32.mrf.mxu0
  %v667 = vadd.f32 %v97, %v666
  %668 = vmatmul.bf16.gmra.mxu0 %v173
  %v669 = vpop.f32.mrf.mxu0
  %v670 = vadd.f32 %v97, %v669
  %v671 = vpop.f32.mrf.mxu0
  %v672 = vadd.f32 %v97, %v671
  %673 = vmatmul.bf16.gmra.mxu0 %v174
  %v674 = vpop.f32.mrf.mxu0
  %v675 = vadd.f32 %v97, %v674
  %v676 = vpop.f32.mrf.mxu0
  %v677 = vadd.f32 %v97, %v676
  %678 = vmatmul.bf16.gmra.mxu0 %v175
  %v679 = vpop.f32.mrf.mxu0
  %v680 = vadd.f32 %v97, %v679
  %v681 = vpop.f32.mrf.mxu0
  %v682 = vadd.f32 %v97, %v681
  %683 = vmatmul.bf16.gmra.mxu0 %v176
  %v684 = vpop.f32.mrf.mxu0
  %v685 = vadd.f32 %v97, %v684
  %v686 = vpop.f32.mrf.mxu0
  %v687 = vadd.f32 %v97, %v686
  %688 = vmatmul.bf16.gmra.mxu0 %v177
  %v689 = vpop.f32.mrf.mxu0
  %v690 = vadd.f32 %v97, %v689
  %v691 = vpop.f32.mrf.mxu0
  %v692 = vadd.f32 %v97, %v691
  %693 = vmatmul.bf16.gmra.mxu0 %v178
  %v694 = vpop.f32.mrf.mxu0
  %v695 = vadd.f32 %v97, %v694
  %v696 = vpop.f32.mrf.mxu0
  %v697 = vadd.f32 %v97, %v696
  %698 = vmatmul.bf16.gmra.mxu0 %v179
  %v699 = vpop.f32.mrf.mxu0
  %v700 = vadd.f32 %v97, %v699
  %v701 = vpop.f32.mrf.mxu0
  %v702 = vadd.f32 %v97, %v701
  %703 = vmatmul.bf16.gmra.mxu0 %v180
  %v704 = vpop.f32.mrf.mxu0
  %v705 = vadd.f32 %v97, %v704
  %v706 = vpop.f32.mrf.mxu0
  %v707 = vadd.f32 %v97, %v706
  %708 = vmatmul.bf16.gmra.mxu0 %v181
  %v709 = vpop.f32.mrf.mxu0
  %v710 = vadd.f32 %v97, %v709
  %v711 = vpop.f32.mrf.mxu0
  %v712 = vadd.f32 %v97, %v711
  %713 = vdwg.mxu0
  %714 = vst [vmem:[#allocation4] sm:$0xff] %v368
  %715 = vst [vmem:[#allocation4 + $0x8] sm:$0xff] %v457
  %716 = vst [vmem:[#allocation4 + $0x10] sm:$0xff] %v546
  %717 = vst [vmem:[#allocation4 + $0x18] sm:$0xff] %v635
  %718 = vst [vmem:[#allocation4 + $0x20] sm:$0xff] %v370
  %719 = vst [vmem:[#allocation4 + $0x28] sm:$0xff] %v459
  %720 = vst [vmem:[#allocation4 + $0x30] sm:$0xff] %v548
  %721 = vst [vmem:[#allocation4 + $0x38] sm:$0xff] %v637
  %722 = vst [vmem:[#allocation4 + $0x40] sm:$0xff] %v373
  %723 = vst [vmem:[#allocation4 + $0x48] sm:$0xff] %v462
  %724 = vst [vmem:[#allocation4 + $0x50] sm:$0xff] %v551
  %725 = vst [vmem:[#allocation4 + $0x58] sm:$0xff] %v640
  %726 = vst [vmem:[#allocation4 + $0x60] sm:$0xff] %v375
  %727 = vst [vmem:[#allocation4 + $0x68] sm:$0xff] %v464
  %728 = vst [vmem:[#allocation4 + $0x70] sm:$0xff] %v553
  %729 = vst [vmem:[#allocation4 + $0x78] sm:$0xff] %v642
  %730 = vst [vmem:[#allocation4 + $0x80] sm:$0xff] %v378
  %731 = vst [vmem:[#allocation4 + $0x88] sm:$0xff] %v467
  %732 = vst [vmem:[#allocation4 + $0x90] sm:$0xff] %v556
  %733 = vst [vmem:[#allocation4 + $0x98] sm:$0xff] %v645
  %734 = vst [vmem:[#allocation4 + $0xa0] sm:$0xff] %v380
  %735 = vst [vmem:[#allocation4 + $0xa8] sm:$0xff] %v469
  %736 = vst [vmem:[#allocation4 + $0xb0] sm:$0xff] %v558
  %737 = vst [vmem:[#allocation4 + $0xb8] sm:$0xff] %v647
  %738 = vst [vmem:[#allocation4 + $0xc0] sm:$0xff] %v383
  %739 = vst [vmem:[#allocation4 + $0xc8] sm:$0xff] %v472
  %740 = vst [vmem:[#allocation4 + $0xd0] sm:$0xff] %v561
  %741 = vst [vmem:[#allocation4 + $0xd8] sm:$0xff] %v650
  %742 = vst [vmem:[#allocation4 + $0xe0] sm:$0xff] %v385
  %743 = vst [vmem:[#allocation4 + $0xe8] sm:$0xff] %v474
  %744 = vst [vmem:[#allocation4 + $0xf0] sm:$0xff] %v563
  %745 = vst [vmem:[#allocation4 + $0xf8] sm:$0xff] %v652
  %746 = vst [vmem:[#allocation4 + $0x100] sm:$0xff] %v388
  %747 = vst [vmem:[#allocation4 + $0x108] sm:$0xff] %v477
  %748 = vst [vmem:[#allocation4 + $0x110] sm:$0xff] %v566
  %749 = vst [vmem:[#allocation4 + $0x118] sm:$0xff] %v655
  %750 = vst [vmem:[#allocation4 + $0x120] sm:$0xff] %v390
  %751 = vst [vmem:[#allocation4 + $0x128] sm:$0xff] %v479
  %752 = vst [vmem:[#allocation4 + $0x130] sm:$0xff] %v568
  %753 = vst [vmem:[#allocation4 + $0x138] sm:$0xff] %v657
  %754 = vst [vmem:[#allocation4 + $0x140] sm:$0xff] %v393
  %755 = vst [vmem:[#allocation4 + $0x148] sm:$0xff] %v482
  %756 = vst [vmem:[#allocation4 + $0x150] sm:$0xff] %v571
  %757 = vst [vmem:[#allocation4 + $0x158] sm:$0xff] %v660
  %758 = vst [vmem:[#allocation4 + $0x160] sm:$0xff] %v395
  %759 = vst [vmem:[#allocation4 + $0x168] sm:$0xff] %v484
  %760 = vst [vmem:[#allocation4 + $0x170] sm:$0xff] %v573
  %761 = vst [vmem:[#allocation4 + $0x178] sm:$0xff] %v662
  %762 = vst [vmem:[#allocation4 + $0x180] sm:$0xff] %v398
  %763 = vst [vmem:[#allocation4 + $0x188] sm:$0xff] %v487
  %764 = vst [vmem:[#allocation4 + $0x190] sm:$0xff] %v576
  %765 = vst [vmem:[#allocation4 + $0x198] sm:$0xff] %v665
  %766 = vst [vmem:[#allocation4 + $0x1a0] sm:$0xff] %v400
  %767 = vst [vmem:[#allocation4 + $0x1a8] sm:$0xff] %v489
  %768 = vst [vmem:[#allocation4 + $0x1b0] sm:$0xff] %v578
  %769 = vst [vmem:[#allocation4 + $0x1b8] sm:$0xff] %v667
  %770 = vst [vmem:[#allocation4 + $0x1c0] sm:$0xff] %v403
  %771 = vst [vmem:[#allocation4 + $0x1c8] sm:$0xff] %v492
  %772 = vst [vmem:[#allocation4 + $0x1d0] sm:$0xff] %v581
  %773 = vst [vmem:[#allocation4 + $0x1d8] sm:$0xff] %v670
  %774 = vst [vmem:[#allocation4 + $0x1e0] sm:$0xff] %v405
  %775 = vst [vmem:[#allocation4 + $0x1e8] sm:$0xff] %v494
  %776 = vst [vmem:[#allocation4 + $0x1f0] sm:$0xff] %v583
  %777 = vst [vmem:[#allocation4 + $0x1f8] sm:$0xff] %v672
  %778 = vst [vmem:[#allocation4 + $0x200] sm:$0xff] %v408
  %779 = vst [vmem:[#allocation4 + $0x208] sm:$0xff] %v497
  %780 = vst [vmem:[#allocation4 + $0x210] sm:$0xff] %v586
  %781 = vst [vmem:[#allocation4 + $0x218] sm:$0xff] %v675
  %782 = vst [vmem:[#allocation4 + $0x220] sm:$0xff] %v410
  %783 = vst [vmem:[#allocation4 + $0x228] sm:$0xff] %v499
  %784 = vst [vmem:[#allocation4 + $0x230] sm:$0xff] %v588
  %785 = vst [vmem:[#allocation4 + $0x238] sm:$0xff] %v677
  %786 = vst [vmem:[#allocation4 + $0x240] sm:$0xff] %v413
  %787 = vst [vmem:[#allocation4 + $0x248] sm:$0xff] %v502
  %788 = vst [vmem:[#allocation4 + $0x250] sm:$0xff] %v591
  %789 = vst [vmem:[#allocation4 + $0x258] sm:$0xff] %v680
  %790 = vst [vmem:[#allocation4 + $0x260] sm:$0xff] %v415
  %791 = vst [vmem:[#allocation4 + $0x268] sm:$0xff] %v504
  %792 = vst [vmem:[#allocation4 + $0x270] sm:$0xff] %v593
  %793 = vst [vmem:[#allocation4 + $0x278] sm:$0xff] %v682
  %794 = vst [vmem:[#allocation4 + $0x280] sm:$0xff] %v418
  %795 = vst [vmem:[#allocation4 + $0x288] sm:$0xff] %v507
  %796 = vst [vmem:[#allocation4 + $0x290] sm:$0xff] %v596
  %797 = vst [vmem:[#allocation4 + $0x298] sm:$0xff] %v685
  %798 = vst [vmem:[#allocation4 + $0x2a0] sm:$0xff] %v420
  %799 = vst [vmem:[#allocation4 + $0x2a8] sm:$0xff] %v509
  %800 = vst [vmem:[#allocation4 + $0x2b0] sm:$0xff] %v598
  %801 = vst [vmem:[#allocation4 + $0x2b8] sm:$0xff] %v687
  %802 = vst [vmem:[#allocation4 + $0x2c0] sm:$0xff] %v423
  %803 = vst [vmem:[#allocation4 + $0x2c8] sm:$0xff] %v512
  %804 = vst [vmem:[#allocation4 + $0x2d0] sm:$0xff] %v601
  %805 = vst [vmem:[#allocation4 + $0x2d8] sm:$0xff] %v690
  %806 = vst [vmem:[#allocation4 + $0x2e0] sm:$0xff] %v425
  %807 = vst [vmem:[#allocation4 + $0x2e8] sm:$0xff] %v514
  %808 = vst [vmem:[#allocation4 + $0x2f0] sm:$0xff] %v603
  %809 = vst [vmem:[#allocation4 + $0x2f8] sm:$0xff] %v692
  %810 = vst [vmem:[#allocation4 + $0x300] sm:$0xff] %v428
  %811 = vst [vmem:[#allocation4 + $0x308] sm:$0xff] %v517
  %812 = vst [vmem:[#allocation4 + $0x310] sm:$0xff] %v606
  %813 = vst [vmem:[#allocation4 + $0x318] sm:$0xff] %v695
  %814 = vst [vmem:[#allocation4 + $0x320] sm:$0xff] %v430
  %815 = vst [vmem:[#allocation4 + $0x328] sm:$0xff] %v519
  %816 = vst [vmem:[#allocation4 + $0x330] sm:$0xff] %v608
  %817 = vst [vmem:[#allocation4 + $0x338] sm:$0xff] %v697
  %818 = vst [vmem:[#allocation4 + $0x340] sm:$0xff] %v433
  %819 = vst [vmem:[#allocation4 + $0x348] sm:$0xff] %v522
  %820 = vst [vmem:[#allocation4 + $0x350] sm:$0xff] %v611
  %821 = vst [vmem:[#allocation4 + $0x358] sm:$0xff] %v700
  %822 = vst [vmem:[#allocation4 + $0x360] sm:$0xff] %v435
  %823 = vst [vmem:[#allocation4 + $0x368] sm:$0xff] %v524
  %824 = vst [vmem:[#allocation4 + $0x370] sm:$0xff] %v613
  %825 = vst [vmem:[#allocation4 + $0x378] sm:$0xff] %v702
  %826 = vst [vmem:[#allocation4 + $0x380] sm:$0xff] %v438
  %827 = vst [vmem:[#allocation4 + $0x388] sm:$0xff] %v527
  %828 = vst [vmem:[#allocation4 + $0x390] sm:$0xff] %v616
  %829 = vst [vmem:[#allocation4 + $0x398] sm:$0xff] %v705
  %830 = vst [vmem:[#allocation4 + $0x3a0] sm:$0xff] %v440
  %831 = vst [vmem:[#allocation4 + $0x3a8] sm:$0xff] %v529
  %832 = vst [vmem:[#allocation4 + $0x3b0] sm:$0xff] %v618
  %833 = vst [vmem:[#allocation4 + $0x3b8] sm:$0xff] %v707
  %834 = vst [vmem:[#allocation4 + $0x3c0] sm:$0xff] %v443
  %835 = vst [vmem:[#allocation4 + $0x3c8] sm:$0xff] %v532
  %836 = vst [vmem:[#allocation4 + $0x3d0] sm:$0xff] %v621
  %837 = vst [vmem:[#allocation4 + $0x3d8] sm:$0xff] %v710
  %838 = vst [vmem:[#allocation4 + $0x3e0] sm:$0xff] %v445
  %839 = vst [vmem:[#allocation4 + $0x3e8] sm:$0xff] %v534
  %840 = vst [vmem:[#allocation4 + $0x3f0] sm:$0xff] %v623
  %841 = vst [vmem:[#allocation4 + $0x3f8] sm:$0xff] %v712
  %s842 = smul.u32 0, 16
  loop: start=0, step=1, limit=16
  $region22: #{char_rnn_forward.2} parent=0 // loop_pre_header
    _
  $region23: #{char_rnn_forward.2} parent=0 // loop_header
    %s844 = sphi 0, %s848
    %p845 = scmp.ge.s32.totalorder %s844, 16
  $region24: #{char_rnn_forward.2} parent=0 // loop_header_branch
    %847 = sbr.rel (%p845) target = $region28
  $region25: #{char_rnn_forward.2} parent=0 // loop_body
    %v849 = vld [vmem:[#allocation2] sm:$0xff]
    %v850 = vld [vmem:[#allocation2 + $0x8] sm:$0xff]
    %v851 = vld [vmem:[#allocation3] sm:$0xff]
    %v852 = vld [vmem:[#allocation3 + $0x8] sm:$0xff]
    %s853 = smul.u32 %s844, 8
    %s854 = smul.addr %s853, 8
    %s855 = scalar_lea.vmem [#allocation4], %s854
    %v856 = vld [vmem:[%s855] sm:$0xff]
    %v857 = vld [vmem:[%s855 + $0x8] sm:$0xff]
    %v858 = vld [vmem:[%s855 + $0x10] sm:$0xff]
    %v859 = vld [vmem:[%s855 + $0x18] sm:$0xff]
    %v860 = vld [vmem:[%s855 + $0x20] sm:$0xff]
    %v861 = vld [vmem:[%s855 + $0x28] sm:$0xff]
    %v862 = vld [vmem:[%s855 + $0x30] sm:$0xff]
    %v863 = vld [vmem:[%s855 + $0x38] sm:$0xff]
    %v864 = vpack.c.bf16 %v850, %v849
    %v865 = vld [vmem:[%s2] sm:$0xff]
    %v866 = vld [vmem:[%s2 + $0x8] sm:$0xff]
    %v867 = vld [vmem:[%s2 + $0x10] sm:$0xff]
    %v868 = vld [vmem:[%s2 + $0x18] sm:$0xff]
    %v869 = vld [vmem:[%s2 + $0x20] sm:$0xff]
    %v870 = vld [vmem:[%s2 + $0x28] sm:$0xff]
    %v871 = vld [vmem:[%s2 + $0x30] sm:$0xff]
    %v872 = vld [vmem:[%s2 + $0x38] sm:$0xff]
    %v873 = vld [vmem:[%s2 + $0x40] sm:$0xff]
    %v874 = vld [vmem:[%s2 + $0x48] sm:$0xff]
    %v875 = vld [vmem:[%s2 + $0x50] sm:$0xff]
    %v876 = vld [vmem:[%s2 + $0x58] sm:$0xff]
    %v877 = vld [vmem:[%s2 + $0x60] sm:$0xff]
    %v878 = vld [vmem:[%s2 + $0x68] sm:$0xff]
    %v879 = vld [vmem:[%s2 + $0x70] sm:$0xff]
    %v880 = vld [vmem:[%s2 + $0x78] sm:$0xff]
    %v881 = vld [vmem:[%s2 + $0x80] sm:$0xff]
    %v882 = vld [vmem:[%s2 + $0x88] sm:$0xff]
    %v883 = vld [vmem:[%s2 + $0x90] sm:$0xff]
    %v884 = vld [vmem:[%s2 + $0x98] sm:$0xff]
    %v885 = vld [vmem:[%s2 + $0xa0] sm:$0xff]
    %v886 = vld [vmem:[%s2 + $0xa8] sm:$0xff]
    %v887 = vld [vmem:[%s2 + $0xb0] sm:$0xff]
    %v888 = vld [vmem:[%s2 + $0xb8] sm:$0xff]
    %v889 = vld [vmem:[%s2 + $0xc0] sm:$0xff]
    %v890 = vld [vmem:[%s2 + $0xc8] sm:$0xff]
    %v891 = vld [vmem:[%s2 + $0xd0] sm:$0xff]
    %v892 = vld [vmem:[%s2 + $0xd8] sm:$0xff]
    %v893 = vld [vmem:[%s2 + $0xe0] sm:$0xff]
    %v894 = vld [vmem:[%s2 + $0xe8] sm:$0xff]
    %v895 = vld [vmem:[%s2 + $0xf0] sm:$0xff]
    %v896 = vld [vmem:[%s2 + $0xf8] sm:$0xff]
    %v929 = vunpack.c.l.b16 %v865
    %v930 = vunpack.c.h.b16 %v865
    %v931 = vunpack.c.l.b16 %v866
    %v932 = vunpack.c.h.b16 %v866
    %v933 = vunpack.c.l.b16 %v867
    %v934 = vunpack.c.h.b16 %v867
    %v935 = vunpack.c.l.b16 %v868
    %v936 = vunpack.c.h.b16 %v868
    %v937 = vunpack.c.l.b16 %v869
    %v938 = vunpack.c.h.b16 %v869
    %v939 = vunpack.c.l.b16 %v870
    %v940 = vunpack.c.h.b16 %v870
    %v941 = vunpack.c.l.b16 %v871
    %v942 = vunpack.c.h.b16 %v871
    %v943 = vunpack.c.l.b16 %v872
    %v944 = vunpack.c.h.b16 %v872
    %v945 = vunpack.c.l.b16 %v873
    %v946 = vunpack.c.h.b16 %v873
    %v947 = vunpack.c.l.b16 %v874
    %v948 = vunpack.c.h.b16 %v874
    %v949 = vunpack.c.l.b16 %v875
    %v950 = vunpack.c.h.b16 %v875
    %v951 = vunpack.c.l.b16 %v876
    %v952 = vunpack.c.h.b16 %v876
    %v953 = vunpack.c.l.b16 %v877
    %v954 = vunpack.c.h.b16 %v877
    %v955 = vunpack.c.l.b16 %v878
    %v956 = vunpack.c.h.b16 %v878
    %v957 = vunpack.c.l.b16 %v879
    %v958 = vunpack.c.h.b16 %v879
    %v959 = vunpack.c.l.b16 %v880
    %v960 = vunpack.c.h.b16 %v880
    %v961 = vunpack.c.l.b16 %v881
    %v962 = vunpack.c.h.b16 %v881
    %v963 = vunpack.c.l.b16 %v882
    %v964 = vunpack.c.h.b16 %v882
    %v965 = vunpack.c.l.b16 %v883
    %v966 = vunpack.c.h.b16 %v883
    %v967 = vunpack.c.l.b16 %v884
    %v968 = vunpack.c.h.b16 %v884
    %v969 = vunpack.c.l.b16 %v885
    %v970 = vunpack.c.h.b16 %v885
    %v971 = vunpack.c.l.b16 %v886
    %v972 = vunpack.c.h.b16 %v886
    %v973 = vunpack.c.l.b16 %v887
    %v974 = vunpack.c.h.b16 %v887
    %v975 = vunpack.c.l.b16 %v888
    %v976 = vunpack.c.h.b16 %v888
    %v977 = vunpack.c.l.b16 %v889
    %v978 = vunpack.c.h.b16 %v889
    %v979 = vunpack.c.l.b16 %v890
    %v980 = vunpack.c.h.b16 %v890
    %v981 = vunpack.c.l.b16 %v891
    %v982 = vunpack.c.h.b16 %v891
    %v983 = vunpack.c.l.b16 %v892
    %v984 = vunpack.c.h.b16 %v892
    %v985 = vunpack.c.l.b16 %v893
    %v986 = vunpack.c.h.b16 %v893
    %v987 = vunpack.c.l.b16 %v894
    %v988 = vunpack.c.h.b16 %v894
    %v989 = vunpack.c.l.b16 %v895
    %v990 = vunpack.c.h.b16 %v895
    %v991 = vunpack.c.l.b16 %v896
    %v992 = vunpack.c.h.b16 %v896
    %v993 = vpack.c.b16 %v933, %v929
    %v994 = vpack.c.b16 %v934, %v930
    %v995 = vpack.c.b16 %v935, %v931
    %v996 = vpack.c.b16 %v936, %v932
    %v997 = vpack.c.b16 %v941, %v937
    %v998 = vpack.c.b16 %v942, %v938
    %v999 = vpack.c.b16 %v943, %v939
    %v1000 = vpack.c.b16 %v944, %v940
    %v1001 = vpack.c.b16 %v949, %v945
    %v1002 = vpack.c.b16 %v950, %v946
    %v1003 = vpack.c.b16 %v951, %v947
    %v1004 = vpack.c.b16 %v952, %v948
    %v1005 = vpack.c.b16 %v957, %v953
    %v1006 = vpack.c.b16 %v958, %v954
    %v1007 = vpack.c.b16 %v959, %v955
    %v1008 = vpack.c.b16 %v960, %v956
    %v1009 = vpack.c.b16 %v965, %v961
    %v1010 = vpack.c.b16 %v966, %v962
    %v1011 = vpack.c.b16 %v967, %v963
    %v1012 = vpack.c.b16 %v968, %v964
    %v1013 = vpack.c.b16 %v973, %v969
    %v1014 = vpack.c.b16 %v974, %v970
    %v1015 = vpack.c.b16 %v975, %v971
    %v1016 = vpack.c.b16 %v976, %v972
    %v1017 = vpack.c.b16 %v981, %v977
    %v1018 = vpack.c.b16 %v982, %v978
    %v1019 = vpack.c.b16 %v983, %v979
    %v1020 = vpack.c.b16 %v984, %v980
    %v1021 = vpack.c.b16 %v989, %v985
    %v1022 = vpack.c.b16 %v990, %v986
    %v1023 = vpack.c.b16 %v991, %v987
    %v1024 = vpack.c.b16 %v992, %v988
    %1057 = vmatpush.bf16.msra.mxu0 %v1021
    %1058 = vmatpush.bf16.msra.mxu0 %v1017
    %1059 = vmatpush.bf16.msra.mxu0 %v1013
    %1060 = vmatpush.bf16.msra.mxu0 %v1009
    %1061 = vmatpush.bf16.msra.mxu0 %v1005
    %1062 = vmatpush.bf16.msra.mxu0 %v1001
    %1063 = vmatpush.bf16.msra.mxu0 %v997
    %1064 = vmatpush.bf16.msra.mxu0 %v993
    %1065 = vmatmul.bf16.gmra.mxu0 %v864
    %v1066 = vpop.f32.mrf.mxu0
    %v1067 = vadd.f32 0.0, %v1066
    %v1068 = vpop.f32.mrf.mxu0
    %v1069 = vadd.f32 0.0, %v1068
    %1070 = vdwg.mxu0
    %1071 = vmatpush.bf16.msra.mxu0 %v1022
    %1072 = vmatpush.bf16.msra.mxu0 %v1018
    %1073 = vmatpush.bf16.msra.mxu0 %v1014
    %1074 = vmatpush.bf16.msra.mxu0 %v1010
    %1075 = vmatpush.bf16.msra.mxu0 %v1006
    %1076 = vmatpush.bf16.msra.mxu0 %v1002
    %1077 = vmatpush.bf16.msra.mxu0 %v998
    %1078 = vmatpush.bf16.msra.mxu0 %v994
    %1079 = vmatmul.bf16.gmra.mxu0 %v864
    %v1080 = vpop.f32.mrf.mxu0
    %v1081 = vadd.f32 0.0, %v1080
    %v1082 = vpop.f32.mrf.mxu0
    %v1083 = vadd.f32 0.0, %v1082
    %1084 = vdwg.mxu0
    %1085 = vmatpush.bf16.msra.mxu0 %v1023
    %1086 = vmatpush.bf16.msra.mxu0 %v1019
    %1087 = vmatpush.bf16.msra.mxu0 %v1015
    %1088 = vmatpush.bf16.msra.mxu0 %v1011
    %1089 = vmatpush.bf16.msra.mxu0 %v1007
    %1090 = vmatpush.bf16.msra.mxu0 %v1003
    %1091 = vmatpush.bf16.msra.mxu0 %v999
    %1092 = vmatpush.bf16.msra.mxu0 %v995
    %1093 = vmatmul.bf16.gmra.mxu0 %v864
    %v1094 = vpop.f32.mrf.mxu0
    %v1095 = vadd.f32 0.0, %v1094
    %v1096 = vpop.f32.mrf.mxu0
    %v1097 = vadd.f32 0.0, %v1096
    %1098 = vdwg.mxu0
    %1099 = vmatpush.bf16.msra.mxu0 %v1024
    %1100 = vmatpush.bf16.msra.mxu0 %v1020
    %1101 = vmatpush.bf16.msra.mxu0 %v1016
    %1102 = vmatpush.bf16.msra.mxu0 %v1012
    %1103 = vmatpush.bf16.msra.mxu0 %v1008
    %1104 = vmatpush.bf16.msra.mxu0 %v1004
    %1105 = vmatpush.bf16.msra.mxu0 %v1000
    %1106 = vmatpush.bf16.msra.mxu0 %v996
    %1107 = vmatmul.bf16.gmra.mxu0 %v864
    %v1108 = vpop.f32.mrf.mxu0
    %v1109 = vadd.f32 0.0, %v1108
    %v1110 = vpop.f32.mrf.mxu0
    %v1111 = vadd.f32 0.0, %v1110
    %1112 = vdwg.mxu0
    %v1113 = vadd.f32 %v856, %v1067
    %v1114 = vadd.f32 %v857, %v1081
    %v1115 = vadd.f32 %v858, %v1095
    %v1116 = vadd.f32 %v859, %v1109
    %v1117 = vadd.f32 %v860, %v1069
    %v1118 = vadd.f32 %v861, %v1083
    %v1119 = vadd.f32 %v862, %v1097
    %v1120 = vadd.f32 %v863, %v1111
    %v1121 = vxor.u32 %v1113, 2147483648
    %v1122 = vxor.u32 %v1117, 2147483648
    %v1123 = vmul.f32 %v1121, 1.442695
    %v1124 = vpow.pop %v1123
    %v1125 = vmul.f32 %v1122, 1.442695
    %v1126 = vpow.pop %v1125
    %v1127 = vadd.f32 %v1124, 1.0
    %v1128 = vadd.f32 %v1126, 1.0
    %v1129 = vrcp.pop %v1127
    %v1130 = vmul.f32 %v1127, %v1129
    %v1131 = vsub.f32 1.0, %v1130
    %v1132 = vmul.f32 %v1129, %v1131
    %v1133 = vadd.f32 %v1129, %v1132
    %vm1134 = vweird.f32 %v1127
    %vm1135 = vweird.f32 %v1129
    %vm1136 = vmor %vm1134, %vm1135
    %v1137 = vsel %vm1136, %v1129, %v1133
    %v1138 = vand.u32 2147483647, %v1127
    %vm1139 = vcmp.eq.f32.partialorder %v1138, 8.507059e+37
    %v1140 = vand.u32 %v1127, 2147483648
    %v1141 = vor.u32 1.1754944e-38, %v1140
    %v1142 = vsel %vm1139, %v1141, %v1137
    %v1143 = vmul.f32 1.0, %v1142
    %v1144 = vrcp.pop %v1128
    %v1145 = vmul.f32 %v1128, %v1144
    %v1146 = vsub.f32 1.0, %v1145
    %v1147 = vmul.f32 %v1144, %v1146
    %v1148 = vadd.f32 %v1144, %v1147
    %vm1149 = vweird.f32 %v1128
    %vm1150 = vweird.f32 %v1144
    %vm1151 = vmor %vm1149, %vm1150
    %v1152 = vsel %vm1151, %v1144, %v1148
    %v1153 = vand.u32 2147483647, %v1128
    %vm1154 = vcmp.eq.f32.partialorder %v1153, 8.507059e+37
    %v1155 = vand.u32 %v1128, 2147483648
    %v1156 = vor.u32 1.1754944e-38, %v1155
    %v1157 = vsel %vm1154, %v1156, %v1152
    %v1158 = vmul.f32 1.0, %v1157
    %v1159 = vxor.u32 %v1114, 2147483648
    %v1160 = vxor.u32 %v1118, 2147483648
    %v1161 = vmul.f32 %v1159, 1.442695
    %v1162 = vpow.pop %v1161
    %v1163 = vmul.f32 %v1160, 1.442695
    %v1164 = vpow.pop %v1163
    %v1165 = vadd.f32 %v1162, 1.0
    %v1166 = vadd.f32 %v1164, 1.0
    %v1167 = vrcp.pop %v1165
    %v1168 = vmul.f32 %v1165, %v1167
    %v1169 = vsub.f32 1.0, %v1168
    %v1170 = vmul.f32 %v1167, %v1169
    %v1171 = vadd.f32 %v1167, %v1170
    %vm1172 = vweird.f32 %v1165
    %vm1173 = vweird.f32 %v1167
    %vm1174 = vmor %vm1172, %vm1173
    %v1175 = vsel %vm1174, %v1167, %v1171
    %v1176 = vand.u32 2147483647, %v1165
    %vm1177 = vcmp.eq.f32.partialorder %v1176, 8.507059e+37
    %v1178 = vand.u32 %v1165, 2147483648
    %v1179 = vor.u32 1.1754944e-38, %v1178
    %v1180 = vsel %vm1177, %v1179, %v1175
    %v1181 = vmul.f32 1.0, %v1180
    %v1182 = vrcp.pop %v1166
    %v1183 = vmul.f32 %v1166, %v1182
    %v1184 = vsub.f32 1.0, %v1183
    %v1185 = vmul.f32 %v1182, %v1184
    %v1186 = vadd.f32 %v1182, %v1185
    %vm1187 = vweird.f32 %v1166
    %vm1188 = vweird.f32 %v1182
    %vm1189 = vmor %vm1187, %vm1188
    %v1190 = vsel %vm1189, %v1182, %v1186
    %v1191 = vand.u32 2147483647, %v1166
    %vm1192 = vcmp.eq.f32.partialorder %v1191, 8.507059e+37
    %v1193 = vand.u32 %v1166, 2147483648
    %v1194 = vor.u32 1.1754944e-38, %v1193
    %v1195 = vsel %vm1192, %v1194, %v1190
    %v1196 = vmul.f32 1.0, %v1195
    %v1197 = vtanh.pop %v1115
    %v1198 = vtanh.pop %v1119
    %v1199 = vxor.u32 %v1116, 2147483648
    %v1200 = vxor.u32 %v1120, 2147483648
    %v1201 = vmul.f32 %v1199, 1.442695
    %v1202 = vpow.pop %v1201
    %v1203 = vmul.f32 %v1200, 1.442695
    %v1204 = vpow.pop %v1203
    %v1205 = vadd.f32 %v1202, 1.0
    %v1206 = vadd.f32 %v1204, 1.0
    %v1207 = vrcp.pop %v1205
    %v1208 = vmul.f32 %v1205, %v1207
    %v1209 = vsub.f32 1.0, %v1208
    %v1210 = vmul.f32 %v1207, %v1209
    %v1211 = vadd.f32 %v1207, %v1210
    %vm1212 = vweird.f32 %v1205
    %vm1213 = vweird.f32 %v1207
    %vm1214 = vmor %vm1212, %vm1213
    %v1215 = vsel %vm1214, %v1207, %v1211
    %v1216 = vand.u32 2147483647, %v1205
    %vm1217 = vcmp.eq.f32.partialorder %v1216, 8.507059e+37
    %v1218 = vand.u32 %v1205, 2147483648
    %v1219 = vor.u32 1.1754944e-38, %v1218
    %v1220 = vsel %vm1217, %v1219, %v1215
    %v1221 = vmul.f32 1.0, %v1220
    %v1222 = vrcp.pop %v1206
    %v1223 = vmul.f32 %v1206, %v1222
    %v1224 = vsub.f32 1.0, %v1223
    %v1225 = vmul.f32 %v1222, %v1224
    %v1226 = vadd.f32 %v1222, %v1225
    %vm1227 = vweird.f32 %v1206
    %vm1228 = vweird.f32 %v1222
    %vm1229 = vmor %vm1227, %vm1228
    %v1230 = vsel %vm1229, %v1222, %v1226
    %v1231 = vand.u32 2147483647, %v1206
    %vm1232 = vcmp.eq.f32.partialorder %v1231, 8.507059e+37
    %v1233 = vand.u32 %v1206, 2147483648
    %v1234 = vor.u32 1.1754944e-38, %v1233
    %v1235 = vsel %vm1232, %v1234, %v1230
    %v1236 = vmul.f32 1.0, %v1235
    %v1237 = vmul.f32 %v1181, %v851
    %v1238 = vmul.f32 %v1196, %v852
    %v1239 = vmul.f32 %v1143, %v1197
    %v1240 = vmul.f32 %v1158, %v1198
    %v1241 = vadd.f32 %v1237, %v1239
    %v1242 = vadd.f32 %v1238, %v1240
    %v1243 = vtanh.pop %v1241
    %v1244 = vtanh.pop %v1242
    %v1245 = vmul.f32 %v1221, %v1243
    %v1246 = vmul.f32 %v1236, %v1244
    %v1247 = vpack.c.bf16 %v1245, %v1245
    %v1248 = vpack.c.bf16 %v1246, %v1246
    %s1249 = smul.u32 %s844, 2
    %s1250 = smul.addr %s1249, 4
    %s1251 = scalar_lea.vmem %s4, %s1250
    %1252 = vst [vmem:[%s1251] sm:$0xf] %v1247
    %1253 = vst [vmem:[%s1251 + $0x4] sm:$0xf] %v1248
    %s1254 = sadd.s32 %s842, %s844
    %p1255 = scmp.lt.s32.totalorder %s1254, 8
    // Predicated region
    $region29: #{char_rnn_forward.2} parent=25 // pred_check
      %p1256 = pneg %p1255
    $region30: #{char_rnn_forward.2} parent=25 // pred_check_branch
      %1258 = sbr.rel (%p1256) target = $region32
    $region31: #{char_rnn_forward.2} parent=25 // pred_region
      %1259 = vst [vmem:[#allocation2] sm:$0xff] %v1245
      %1260 = vst [vmem:[#allocation2 + $0x8] sm:$0xff] %v1246
      %1261 = vst [vmem:[#allocation3] sm:$0xff] %v1241
      %1262 = vst [vmem:[#allocation3 + $0x8] sm:$0xff] %v1242
    $region32: #{char_rnn_forward.2} parent=25 // pred_fallthru
      _
  $region26: #{char_rnn_forward.2} parent=0 // loop_footer
    %s848 = sadd.s32 1, %s844
  $region27: #{char_rnn_forward.2} parent=0 // loop_footer_branch
    %843 = sbr.rel target = $region23
  $region28: #{char_rnn_forward.2} parent=0 // loop_exit
    _
  %v1263 = vld [vmem:[#allocation2] sm:$0xff]
  %v1264 = vld [vmem:[#allocation2 + $0x8] sm:$0xff]
  %1265 = vst [vmem:[%s5] sm:$0xff] %v1263
  %1266 = vst [vmem:[%s5 + $0x8] sm:$0xff] %v1264
  %v1267 = vld [vmem:[#allocation3] sm:$0xff]
  %v1268 = vld [vmem:[#allocation3 + $0x8] sm:$0xff]
  %1269 = vst [vmem:[%s6] sm:$0xff] %v1267
  %1270 = vst [vmem:[%s6 + $0x8] sm:$0xff] %v1268
  // Predicated region
  $region33: #{char_rnn_forward.2} parent=0 // pred_check
    _
  $region34: #{char_rnn_forward.2} parent=0 // pred_check_branch
    %1272 = sbr.rel (0) target = $region36
  $region35: #{char_rnn_forward.2} parent=0 // pred_region
    _
  $region36: #{char_rnn_forward.2} parent=0 // pred_fallthru
    _
  // Predicated region
  $region37: #{char_rnn_forward.2} parent=0 // pred_check
    _
  $region38: #{char_rnn_forward.2} parent=0 // pred_check_branch
    %1274 = sbr.rel (0) target = $region40
  $region39: #{char_rnn_forward.2} parent=0 // pred_region
    _
  $region40: #{char_rnn_forward.2} parent=0 // pred_fallthru
    _
  // Predicated region
  $region41: #{char_rnn_forward.2} parent=0 // pred_check
    _
  $region42: #{char_rnn_forward.2} parent=0 // pred_check_branch
    %1276 = sbr.rel (0) target = $region44
  $region43: #{char_rnn_forward.2} parent=0 // pred_region
    _
  $region44: #{char_rnn_forward.2} parent=0 // pred_fallthru
    _
  // Predicated region
  $region45: #{char_rnn_forward.2} parent=0 // pred_check
    _
  $region46: #{char_rnn_forward.2} parent=0 // pred_check_branch
    %1278 = sbr.rel (0) target = $region48
  $region47: #{char_rnn_forward.2} parent=0 // pred_region
    _
  $region48: #{char_rnn_forward.2} parent=0 // pred_fallthru
    _
  // Predicated region
  $region49: #{char_rnn_forward.2} parent=0 // pred_check
    _
  $region50: #{char_rnn_forward.2} parent=0 // pred_check_branch
    %1280 = sbr.rel (0) target = $region52
  $region51: #{char_rnn_forward.2} parent=0 // pred_region
    _
  $region52: #{char_rnn_forward.2} parent=0 // pred_fallthru
    _
  // Predicated region
  $region53: #{char_rnn_forward.2} parent=0 // pred_check
    _
  $region54: #{char_rnn_forward.2} parent=0 // pred_check_branch
    %1282 = sbr.rel (0) target = $region56
  $region55: #{char_rnn_forward.2} parent=0 // pred_region
    _
  $region56: #{char_rnn_forward.2} parent=0 // pred_fallthru
    _

</llo_original>
